<compile_context>
chip_gen: v6e
topology: v6e:2x2x1
jax: 0.10.0
libtpu: 0.0.40
codegen_flags: <defaults>
</compile_context>

<pallas_src>
import functools

import jax
import jax.numpy as jnp
from jax.experimental import pallas as pl
from jax.experimental.pallas import tpu as pltpu


def _round_up(v, m):
    return ((v + m - 1) // m) * m


# ----------------------------- Pallas kernel ------------------------------ #

def _fused_seg_kernel(x_ref, w1_ref, b1_ref, w2a_ref, b2a_ref,
                      wc_ref, bc_ref, slab_ref, *, c_out, c_aux, ncls_pad):
    """Fused backbone + classifier + aux_classifier for one P-tile.

    x_ref:    (tile_p, Cin)          bf16
    w1_ref:   (Cin, Caux)            bf16,  b1_ref:  (1, Caux)          f32
    w2a_ref:  (Caux, Cout+ncls_pad)  bf16,  b2a_ref: (1, Cout+ncls_pad) f32
    wc_ref:   (Cout, ncls_pad)       bf16,  bc_ref:  (1, ncls_pad)      f32
    slab_ref: (Cslab, tile_p)        bf16 channel-major output
              rows [0:c_out]=feat, [c_out:c_out+c_aux]=aux_feat,
              then ncls_pad logits, then ncls_pad aux logits.
    """
    x = x_ref[...]

    # backbone conv1 (+ReLU) -> aux features
    h1 = jnp.dot(x, w1_ref[...], preferred_element_type=jnp.float32)
    h1 = jnp.maximum(h1 + b1_ref[...], 0.0)
    h1b = h1.astype(jnp.bfloat16)

    # fused backbone conv2 + aux head: one MXU pass on h1
    h2a = jnp.dot(h1b, w2a_ref[...], preferred_element_type=jnp.float32)
    h2a = h2a + b2a_ref[...]
    h2 = jnp.maximum(h2a[:, :c_out], 0.0)      # out features (ReLU)
    aux_logits = h2a[:, c_out:]                # aux logits (no ReLU)
    h2b = h2.astype(jnp.bfloat16)

    # classifier head
    logits = jnp.dot(h2b, wc_ref[...], preferred_element_type=jnp.float32)
    logits = logits + bc_ref[...]

    # Channel-major, sublane-aligned direct stores (no concat temporaries).
    # Transposes are done in f32 (XLU, idle in this kernel) then cast.
    o_feat = 0
    o_auxf = c_out
    o_out = c_out + c_aux
    o_aux = o_out + ncls_pad
    slab_ref[o_feat:o_feat + c_out, :] = h2.T.astype(jnp.bfloat16)
    slab_ref[o_auxf:o_auxf + c_aux, :] = h1.T.astype(jnp.bfloat16)
    slab_ref[o_out:o_out + ncls_pad, :] = logits.T.astype(jnp.bfloat16)
    slab_ref[o_aux:o_aux + ncls_pad, :] = aux_logits.T.astype(jnp.bfloat16)


# ------------------------------ fused wrapper ------------------------------ #

def fused_segmentation_slab(x_flat, params, *, tile_p=4096):
    """Run the fused model on (P, Cin) bf16 rows.

    Returns ((Cslab, P) bf16 channel-major slab, layout dict).
    """
    w1, b1 = params["backbone_conv1"]
    w2, b2 = params["backbone_conv2"]
    wc, bc = params["classifier"]
    wa, ba = params["aux_classifier"]

    p, c_in = x_flat.shape
    c_aux = w1.shape[1]
    c_out = w2.shape[1]
    ncls = wc.shape[1]
    assert c_aux % 8 == 0 and c_out % 8 == 0, "feature widths must be 8-aligned"

    # Pad classifier heads to an 8-channel segment so every slab store is
    # sublane-aligned and unmasked.
    ncls_pad = _round_up(ncls, 8)
    pad_c = ncls_pad - ncls
    wc_p = jnp.pad(wc, ((0, 0), (0, pad_c)))
    bc_p = jnp.pad(bc, ((0, pad_c),))
    wa_p = jnp.pad(wa, ((0, 0), (0, pad_c)))
    ba_p = jnp.pad(ba, ((0, pad_c),))

    # Fuse conv2 and the aux head into a single weight matrix (one MXU push).
    w2a = jnp.concatenate([w2, wa_p], axis=1)                 # (Caux, Cout+ncls_pad)
    b2a = jnp.concatenate([b2, ba_p], axis=0)                 # (Cout+ncls_pad,)

    c_slab = c_out + c_aux + 2 * ncls_pad                     # 32+16+8+8 = 64

    # Tile choice: big tiles amortize per-step overhead, but keep >=2 grid
    # steps so a 2-TensorCore chip (v7x) shards the parallel axis.
    tile_p = max(128, min(tile_p, _round_up(pl.cdiv(p, 2), 128)))
    assert tile_p % 128 == 0
    grid_p = pl.cdiv(p, tile_p)
    p_pad = grid_p * tile_p
    if p_pad != p:
        # Padded rows compute relu(bias) and land in slab columns >= p; they
        # are sliced off below and must never be consumed.
        x_flat = jnp.pad(x_flat, ((0, p_pad - p), (0, 0)))

    w_bytes = 2 * (c_in * c_aux + c_aux * (c_out + ncls_pad) + c_out * ncls_pad)
    cost = pl.CostEstimate(
        flops=2 * p_pad * (c_in * c_aux + c_aux * (c_out + ncls_pad)
                           + c_out * ncls_pad),
        transcendentals=0,
        bytes_accessed=p_pad * c_in * 2 + c_slab * p_pad * 2 + w_bytes
                       + 4 * (c_aux + c_out + 2 * ncls_pad),
    )

    kern = functools.partial(_fused_seg_kernel,
                             c_out=c_out, c_aux=c_aux, ncls_pad=ncls_pad)
    slab = pl.pallas_call(
        kern,
        out_shape=jax.ShapeDtypeStruct((c_slab, p_pad), jnp.bfloat16),
        grid=(grid_p,),
        in_specs=[
            pl.BlockSpec((tile_p, c_in), lambda i: (i, 0)),
            # Weights/biases: full-array blocks, constant index maps.
            pl.BlockSpec((c_in, c_aux), lambda i: (0, 0)),
            pl.BlockSpec((1, c_aux), lambda i: (0, 0)),
            pl.BlockSpec((c_aux, c_out + ncls_pad), lambda i: (0, 0)),
            pl.BlockSpec((1, c_out + ncls_pad), lambda i: (0, 0)),
            pl.BlockSpec((c_out, ncls_pad), lambda i: (0, 0)),
            pl.BlockSpec((1, ncls_pad), lambda i: (0, 0)),
        ],
        out_specs=pl.BlockSpec((c_slab, tile_p), lambda i: (0, i)),
        compiler_params=pltpu.CompilerParams(
            dimension_semantics=("parallel",)),
        cost_estimate=cost,
    )(x_flat,
      w1, b1.reshape(1, c_aux).astype(jnp.float32),
      w2a, b2a.reshape(1, c_out + ncls_pad).astype(jnp.float32),
      wc_p, bc_p.reshape(1, ncls_pad).astype(jnp.float32))

    if p_pad != p:
        slab = slab[:, :p]
    layout = {
        "feat": (0, c_out),
        "aux_feat": (c_out, c_aux),
        "out": (c_out + c_aux, ncls),
        "aux": (c_out + c_aux + ncls_pad, ncls),
    }
    return slab, layout


# -------------------------- synthetic sub-modules -------------------------- #

def init_params(key, c_in, c_aux, c_out, num_classes):
    ks = jax.random.split(key, 8)

    def lin(kw, kb, cin, cout):
        w = jax.random.normal(kw, (cin, cout), jnp.float32) / jnp.sqrt(cin)
        b = jax.random.normal(kb, (cout,), jnp.float32) * 0.01
        # Weights stored bf16 (mem-bound roofline); biases stay f32.
        return w.astype(jnp.bfloat16), b

    return {
        "backbone_conv1": lin(ks[0], ks[1], c_in, c_aux),   # x   -> aux feats
        "backbone_conv2": lin(ks[2], ks[3], c_aux, c_out),  # aux -> out feats
        "classifier": lin(ks[4], ks[5], c_out, num_classes),
        "aux_classifier": lin(ks[6], ks[7], c_aux, num_classes),
    }


# ----------------------- _SimpleSegmentationModel.forward ------------------ #

def simple_segmentation_forward(params, x_nchw, *, tile_p=4096):
    input_shape = x_nchw.shape[-2:]  # parity with PyTorch (unused: no interp)
    del input_shape

    n, c_in, h, w = x_nchw.shape
    p = n * h * w

    # Single NCHW -> NHWC transpose + flatten + bf16 cast (one pass over x).
    x_flat = jnp.transpose(x_nchw, (0, 2, 3, 1)).reshape(p, c_in)
    x_flat = x_flat.astype(jnp.bfloat16)

    slab, layout = fused_segmentation_slab(x_flat, params, tile_p=tile_p)

    # Channel-major slab (C, P) -> (C, N, H, W) -> (N, C, H, W): a contiguous
    # block permute, no minor-dim transpose.
    def unflatten(name, dtype):
        lo, width = layout[name]
        blk = slab[lo:lo + width, :].reshape(width, n, h, w)
        return jnp.transpose(blk, (1, 0, 2, 3)).astype(dtype)

    result = {}
    # Pass-through features stay bf16 (matches slab dtype; avoids an extra
    # f32 write pass).  Logits are small -> return f32 for downstream losses.
    result["feat"] = unflatten("feat", jnp.bfloat16)
    result["aux_feat"] = unflatten("aux_feat", jnp.bfloat16)
    result["out"] = unflatten("out", jnp.float32)
    result["aux"] = unflatten("aux", jnp.float32)
    return result


# ---------------------------------- main ----------------------------------- #

if __name__ == "__main__":
    key = jax.random.PRNGKey(0)
    k_x, k_p = jax.random.split(key)

    N, C_in, H, W = 2, 4, 16, 16
    C_aux, C_out, NUM_CLASSES = 16, 32, 5

    x = jax.random.normal(k_x, (N, C_in, H, W), jnp.float32)
    params = init_params(k_p, C_in, C_aux, C_out, NUM_CLASSES)

    fwd = jax.jit(simple_segmentation_forward)
    result = fwd(params, x)
    for v in result.values():
        jax.block_until_ready(v)

    assert result["feat"].shape == (N, C_out, H, W)
    assert result["aux_feat"].shape == (N, C_aux, H, W)
    assert result["out"].shape == (N, NUM_CLASSES, H, W)
    assert result["aux"].shape == (N, NUM_CLASSES, H, W)

    # Cross-check against a plain-JAX reference of the same synthetic model.
    xf = jnp.transpose(x, (0, 2, 3, 1)).reshape(N * H * W, C_in)
    xf = xf.astype(jnp.bfloat16)
    w1, b1 = params["backbone_conv1"]; w2, b2 = params["backbone_conv2"]
    wc, bc = params["classifier"]; wa, ba = params["aux_classifier"]
    h1 = jnp.maximum(jnp.dot(xf, w1, preferred_element_type=jnp.float32) + b1, 0.0)
    h2 = jnp.maximum(jnp.dot(h1.astype(jnp.bfloat16), w2,
                             preferred_element_type=jnp.float32) + b2, 0.0)
    ref_out = jnp.dot(h2.astype(jnp.bfloat16), wc,
                      preferred_element_type=jnp.float32) + bc
    ref_aux = jnp.dot(h1.astype(jnp.bfloat16), wa,
                      preferred_element_type=jnp.float32) + ba

    got_out = jnp.transpose(result["out"], (0, 2, 3, 1)).reshape(-1, NUM_CLASSES)
    got_aux = jnp.transpose(result["aux"], (0, 2, 3, 1)).reshape(-1, NUM_CLASSES)
    got_feat = jnp.transpose(result["feat"], (0, 2, 3, 1)).reshape(-1, C_out)
    assert jnp.max(jnp.abs(got_out - ref_out)) < 0.05, "out mismatch vs JAX ref"
    assert jnp.max(jnp.abs(got_aux - ref_aux)) < 0.05, "aux mismatch vs JAX ref"
    assert jnp.max(jnp.abs(got_feat.astype(jnp.float32) - h2)) < 0.05, \
        "feat mismatch vs JAX ref"

    print("KERNEL_OK")
</pallas_src>

<mosaic_0001>
module attributes {stable_mosaic.version = 11 : i64} {
  func.func @_fused_seg_kernel(%arg0: i32, %arg1: memref<256x4xbf16, #tpu.memory_space<vmem>>, %arg2: memref<4x16xbf16, #tpu.memory_space<vmem>>, %arg3: memref<1x16xf32, #tpu.memory_space<vmem>>, %arg4: memref<16x40xbf16, #tpu.memory_space<vmem>>, %arg5: memref<1x40xf32, #tpu.memory_space<vmem>>, %arg6: memref<32x8xbf16, #tpu.memory_space<vmem>>, %arg7: memref<1x8xf32, #tpu.memory_space<vmem>>, %arg8: memref<64x256xbf16, #tpu.memory_space<vmem>>) attributes {dimension_semantics = [#tpu.dimension_semantics<parallel>], iteration_bounds = array<i64: 2>, scalar_prefetch = 0 : i64, scratch_operands = 0 : i64, tpu.core_type = #tpu.core_type<tc>, window_params = [{transform_indices = @transform_0, window_bounds = array<i64: 256, 4>}, {pipeline_mode = #tpu.pipeline_mode<synchronous>, transform_indices = @transform_1, window_bounds = array<i64: 4, 16>}, {pipeline_mode = #tpu.pipeline_mode<synchronous>, transform_indices = @transform_2, window_bounds = array<i64: 1, 16>}, {pipeline_mode = #tpu.pipeline_mode<synchronous>, transform_indices = @transform_3, window_bounds = array<i64: 16, 40>}, {pipeline_mode = #tpu.pipeline_mode<synchronous>, transform_indices = @transform_4, window_bounds = array<i64: 1, 40>}, {pipeline_mode = #tpu.pipeline_mode<synchronous>, transform_indices = @transform_5, window_bounds = array<i64: 32, 8>}, {pipeline_mode = #tpu.pipeline_mode<synchronous>, transform_indices = @transform_6, window_bounds = array<i64: 1, 8>}, {transform_indices = @transform_7, window_bounds = array<i64: 64, 256>}]} {
    %c0 = arith.constant 0 : index
    %c0_0 = arith.constant 0 : index
    %0 = vector.load %arg1[%c0, %c0_0] : memref<256x4xbf16, #tpu.memory_space<vmem>>, vector<256x4xbf16>
    %c0_1 = arith.constant 0 : index
    %c0_2 = arith.constant 0 : index
    %1 = vector.load %arg2[%c0_1, %c0_2] : memref<4x16xbf16, #tpu.memory_space<vmem>>, vector<4x16xbf16>
    %cst = arith.constant dense<0.000000e+00> : vector<256x16xf32>
    %2 = tpu.matmul %0, %1, %cst {dimension_numbers = #tpu.dot_dimension_numbers<[1], [0], [0], [1], [0, 0, 1, 1], [], []>} : vector<256x4xbf16>, vector<4x16xbf16>, vector<256x16xf32> -> vector<256x16xf32>
    %c0_3 = arith.constant 0 : index
    %c0_4 = arith.constant 0 : index
    %3 = vector.load %arg3[%c0_3, %c0_4] : memref<1x16xf32, #tpu.memory_space<vmem>>, vector<1x16xf32>
    %4 = vector.broadcast %3 : vector<1x16xf32> to vector<256x16xf32>
    %5 = arith.addf %2, %4 : vector<256x16xf32>
    %cst_5 = arith.constant 0.000000e+00 : f32
    %6 = vector.broadcast %cst_5 : f32 to vector<256x16xf32>
    %7 = arith.maximumf %5, %6 : vector<256x16xf32>
    %8 = arith.truncf %7 : vector<256x16xf32> to vector<256x16xbf16>
    %c0_6 = arith.constant 0 : index
    %c0_7 = arith.constant 0 : index
    %9 = vector.load %arg4[%c0_6, %c0_7] : memref<16x40xbf16, #tpu.memory_space<vmem>>, vector<16x40xbf16>
    %cst_8 = arith.constant dense<0.000000e+00> : vector<256x40xf32>
    %10 = tpu.matmul %8, %9, %cst_8 {dimension_numbers = #tpu.dot_dimension_numbers<[1], [0], [0], [1], [0, 0, 1, 1], [], []>} : vector<256x16xbf16>, vector<16x40xbf16>, vector<256x40xf32> -> vector<256x40xf32>
    %c0_9 = arith.constant 0 : index
    %c0_10 = arith.constant 0 : index
    %11 = vector.load %arg5[%c0_9, %c0_10] : memref<1x40xf32, #tpu.memory_space<vmem>>, vector<1x40xf32>
    %12 = vector.broadcast %11 : vector<1x40xf32> to vector<256x40xf32>
    %13 = arith.addf %10, %12 : vector<256x40xf32>
    %14 = vector.extract_strided_slice %13 {offsets = [0, 0], sizes = [256, 32], strides = [1, 1]} : vector<256x40xf32> to vector<256x32xf32>
    %cst_11 = arith.constant 0.000000e+00 : f32
    %15 = vector.broadcast %cst_11 : f32 to vector<256x32xf32>
    %16 = arith.maximumf %14, %15 : vector<256x32xf32>
    %17 = vector.extract_strided_slice %13 {offsets = [0, 32], sizes = [256, 8], strides = [1, 1]} : vector<256x40xf32> to vector<256x8xf32>
    %18 = arith.truncf %16 : vector<256x32xf32> to vector<256x32xbf16>
    %c0_12 = arith.constant 0 : index
    %c0_13 = arith.constant 0 : index
    %19 = vector.load %arg6[%c0_12, %c0_13] : memref<32x8xbf16, #tpu.memory_space<vmem>>, vector<32x8xbf16>
    %cst_14 = arith.constant dense<0.000000e+00> : vector<256x8xf32>
    %20 = tpu.matmul %18, %19, %cst_14 {dimension_numbers = #tpu.dot_dimension_numbers<[1], [0], [0], [1], [0, 0, 1, 1], [], []>} : vector<256x32xbf16>, vector<32x8xbf16>, vector<256x8xf32> -> vector<256x8xf32>
    %c0_15 = arith.constant 0 : index
    %c0_16 = arith.constant 0 : index
    %21 = vector.load %arg7[%c0_15, %c0_16] : memref<1x8xf32, #tpu.memory_space<vmem>>, vector<1x8xf32>
    %22 = vector.broadcast %21 : vector<1x8xf32> to vector<256x8xf32>
    %23 = arith.addf %20, %22 : vector<256x8xf32>
    %24 = tpu.transpose %16, [1, 0] : vector<256x32xf32> -> vector<32x256xf32>
    %25 = arith.truncf %24 : vector<32x256xf32> to vector<32x256xbf16>
    %c0_17 = arith.constant 0 : index
    %c0_18 = arith.constant 0 : index
    %26 = vector.load %arg8[%c0_17, %c0_18] : memref<64x256xbf16, #tpu.memory_space<vmem>>, vector<32x256xbf16>
    tpu.vector_store %arg8[%c0_17, %c0_18], %25 {strides = array<i32>} : memref<64x256xbf16, #tpu.memory_space<vmem>>, vector<32x256xbf16>,
    %27 = tpu.transpose %7, [1, 0] : vector<256x16xf32> -> vector<16x256xf32>
    %28 = arith.truncf %27 : vector<16x256xf32> to vector<16x256xbf16>
    %c32 = arith.constant 32 : index
    %c0_19 = arith.constant 0 : index
    %29 = vector.load %arg8[%c32, %c0_19] : memref<64x256xbf16, #tpu.memory_space<vmem>>, vector<16x256xbf16>
    tpu.vector_store %arg8[%c32, %c0_19], %28 {strides = array<i32>} : memref<64x256xbf16, #tpu.memory_space<vmem>>, vector<16x256xbf16>,
    %30 = tpu.transpose %23, [1, 0] : vector<256x8xf32> -> vector<8x256xf32>
    %31 = arith.truncf %30 : vector<8x256xf32> to vector<8x256xbf16>
    %c48 = arith.constant 48 : index
    %c0_20 = arith.constant 0 : index
    %32 = vector.load %arg8[%c48, %c0_20] : memref<64x256xbf16, #tpu.memory_space<vmem>>, vector<8x256xbf16>
    tpu.vector_store %arg8[%c48, %c0_20], %31 {strides = array<i32>} : memref<64x256xbf16, #tpu.memory_space<vmem>>, vector<8x256xbf16>,
    %33 = tpu.transpose %17, [1, 0] : vector<256x8xf32> -> vector<8x256xf32>
    %34 = arith.truncf %33 : vector<8x256xf32> to vector<8x256xbf16>
    %c56 = arith.constant 56 : index
    %c0_21 = arith.constant 0 : index
    %35 = vector.load %arg8[%c56, %c0_21] : memref<64x256xbf16, #tpu.memory_space<vmem>>, vector<8x256xbf16>
    tpu.vector_store %arg8[%c56, %c0_21], %34 {strides = array<i32>} : memref<64x256xbf16, #tpu.memory_space<vmem>>, vector<8x256xbf16>,
    return
  }
  func.func @transform_0(%arg0: i32) -> (i32, i32) {
    %c0_i32 = arith.constant 0 : i32
    %c0_i32_0 = arith.constant 0 : i32
    return %arg0, %c0_i32 : i32, i32
  }
  func.func @transform_1(%arg0: i32) -> (i32, i32) {
    %c0_i32 = arith.constant 0 : i32
    %c0_i32_0 = arith.constant 0 : i32
    %c0_i32_1 = arith.constant 0 : i32
    return %c0_i32, %c0_i32_0 : i32, i32
  }
  func.func @transform_2(%arg0: i32) -> (i32, i32) {
    %c0_i32 = arith.constant 0 : i32
    %c0_i32_0 = arith.constant 0 : i32
    %c0_i32_1 = arith.constant 0 : i32
    return %c0_i32, %c0_i32_0 : i32, i32
  }
  func.func @transform_3(%arg0: i32) -> (i32, i32) {
    %c0_i32 = arith.constant 0 : i32
    %c0_i32_0 = arith.constant 0 : i32
    %c0_i32_1 = arith.constant 0 : i32
    return %c0_i32, %c0_i32_0 : i32, i32
  }
  func.func @transform_4(%arg0: i32) -> (i32, i32) {
    %c0_i32 = arith.constant 0 : i32
    %c0_i32_0 = arith.constant 0 : i32
    %c0_i32_1 = arith.constant 0 : i32
    return %c0_i32, %c0_i32_0 : i32, i32
  }
  func.func @transform_5(%arg0: i32) -> (i32, i32) {
    %c0_i32 = arith.constant 0 : i32
    %c0_i32_0 = arith.constant 0 : i32
    %c0_i32_1 = arith.constant 0 : i32
    return %c0_i32, %c0_i32_0 : i32, i32
  }
  func.func @transform_6(%arg0: i32) -> (i32, i32) {
    %c0_i32 = arith.constant 0 : i32
    %c0_i32_0 = arith.constant 0 : i32
    %c0_i32_1 = arith.constant 0 : i32
    return %c0_i32, %c0_i32_0 : i32, i32
  }
  func.func @transform_7(%arg0: i32) -> (i32, i32) {
    %c0_i32 = arith.constant 0 : i32
    %c0_i32_0 = arith.constant 0 : i32
    return %c0_i32, %arg0 : i32, i32
  }
}

</mosaic_0001>

<llo_original>
// kernel: simple_segmentation_forward.1
$region0: #{simple_segmentation_forward.1}
  #allocation0 [shape = 'u32[]', space=smem, size = 0x4, offset = 0x4, fixed_abs, tag = 'smem constant byte address 0x4 - core index']
  #allocation1 [shape = 'u32[144,128]{1,0:T(1,128)}', space=vmem, size = 0x12000, scoped, tag = 'internal scratch']
  %s0 = inlined_call_operand.vmem [shape: bf16[512,4], index: 0, kind: input, shape index: {}]
  %s1 = inlined_call_operand.vmem [shape: bf16[4,16], index: 1, kind: input, shape index: {}]
  %s2 = inlined_call_operand.vmem [shape: f32[1,16], index: 2, kind: input, shape index: {}]
  %s3 = inlined_call_operand.vmem [shape: bf16[16,40], index: 3, kind: input, shape index: {}]
  %s4 = inlined_call_operand.vmem [shape: f32[1,40], index: 4, kind: input, shape index: {}]
  %s5 = inlined_call_operand.vmem [shape: bf16[32,8], index: 5, kind: input, shape index: {}]
  %s6 = inlined_call_operand.vmem [shape: f32[1,8], index: 6, kind: input, shape index: {}]
  %s7 = inlined_call_operand.vmem [shape: bf16[64,512], index: 7, kind: output, shape index: {}]
  %s8 = sld [smem:[#allocation0]]
  $region95: #{simple_segmentation_forward.1} parent=0
    _
  %s10 = ssub.s32 1, %s8
  %s11 = scalar_select 0, %s10, %s8
  $region1: #{simple_segmentation_forward.1} parent=0
    #allocation2 [shape = 'u8[65536]{0}', space=vmem, size = 0x10000, scoped, tag = 'output window, operand 0']
    loop: start=0, step=1, limit=4
    $region2: #{simple_segmentation_forward.1} parent=1 // loop_pre_header
      _
    $region3: #{simple_segmentation_forward.1} parent=1 // loop_header
      %s13 = sphi 0, %s17
      %p14 = scmp.ge.s32.totalorder %s13, 4
      %s23 = sphi 0, %s25
      %s26 = sphi 0, %s23
      %s27 = sphi 0, %s26
      %s43 = sphi 0, %s27
      %s47 = sphi 0, %s47
      %s49 = sphi 0, %s47
      %s50 = sphi 0, %s49
      %s64 = sphi 0, %s50
      %s68 = sphi 0, %s68
      %s70 = sphi 0, %s68
      %s71 = sphi 0, %s70
      %s85 = sphi 0, %s71
      %s89 = sphi 0, %s89
      %s91 = sphi 0, %s89
      %s92 = sphi 0, %s91
      %s106 = sphi 0, %s92
      %s110 = sphi 0, %s110
      %s112 = sphi 0, %s110
      %s113 = sphi 0, %s112
      %s127 = sphi 0, %s113
      %s131 = sphi 0, %s131
      %s133 = sphi 0, %s131
      %s134 = sphi 0, %s133
      %s148 = sphi 0, %s134
      %s152 = sphi 0, %s152
      %s154 = sphi 0, %s152
      %s155 = sphi 0, %s154
      %s169 = sphi 0, %s155
      %s175 = sphi 0, %s177
      %s178 = sphi 0, %s175
      %s179 = sphi 0, %s178
      %s195 = sphi 0, %s179
    $region4: #{simple_segmentation_forward.1} parent=1 // loop_header_branch
      %16 = sbr.rel (%p14) target = $region8
    $region5: #{simple_segmentation_forward.1} parent=1 // loop_body
      %s18 = ssub.s32 %s13, 1
      %s19 = ssub.s32 %s13, 2
      %s20 = sadd.s32 %s13, 1
      %s21 = ssub.s32 %s13, %s20
      %p22 = scmp.eq.s32.totalorder %s21, 0
      %s24 = sadd.s32 %s23, 1
      %s25 = scalar_select %p22, %s23, %s24
      %p28 = pneg %p22
      %p29 = scmp.eq.s32.totalorder %s13, 1
      %p30 = por %p28, %p29
      %p31 = scmp.ne.s32.totalorder %s23, %s26
      %p32 = scmp.eq.s32.totalorder %s13, 0
      %p33 = por %p31, %p32
      %p34 = scmp.ne.s32.totalorder %s23, %s26
      %p35 = scmp.eq.s32.totalorder %s18, 1
      %p36 = por %p34, %p35
      %p37 = scmp.ne.s32.totalorder %s26, %s27
      %p38 = scmp.eq.s32.totalorder %s18, 0
      %p39 = por %p37, %p38
      %p40 = scmp.ne.s32.totalorder %s26, %s27
      %p41 = scmp.eq.s32.totalorder %s19, 1
      %p42 = por %p40, %p41
      %p44 = scmp.ne.s32.totalorder %s27, %s43
      %p45 = scmp.eq.s32.totalorder %s19, 0
      %p46 = por %p44, %p45
      %s48 = sadd.s32 %s47, 1
      %p51 = scmp.eq.s32.totalorder %s13, 1
      %p52 = scmp.ne.s32.totalorder %s47, %s49
      %p53 = scmp.eq.s32.totalorder %s13, 0
      %p54 = por %p52, %p53
      %p55 = scmp.ne.s32.totalorder %s47, %s49
      %p56 = scmp.eq.s32.totalorder %s18, 1
      %p57 = por %p55, %p56
      %p58 = scmp.ne.s32.totalorder %s49, %s50
      %p59 = scmp.eq.s32.totalorder %s18, 0
      %p60 = por %p58, %p59
      %p61 = scmp.ne.s32.totalorder %s49, %s50
      %p62 = scmp.eq.s32.totalorder %s19, 1
      %p63 = por %p61, %p62
      %p65 = scmp.ne.s32.totalorder %s50, %s64
      %p66 = scmp.eq.s32.totalorder %s19, 0
      %p67 = por %p65, %p66
      %s69 = sadd.s32 %s68, 1
      %p72 = scmp.eq.s32.totalorder %s13, 1
      %p73 = scmp.ne.s32.totalorder %s68, %s70
      %p74 = scmp.eq.s32.totalorder %s13, 0
      %p75 = por %p73, %p74
      %p76 = scmp.ne.s32.totalorder %s68, %s70
      %p77 = scmp.eq.s32.totalorder %s18, 1
      %p78 = por %p76, %p77
      %p79 = scmp.ne.s32.totalorder %s70, %s71
      %p80 = scmp.eq.s32.totalorder %s18, 0
      %p81 = por %p79, %p80
      %p82 = scmp.ne.s32.totalorder %s70, %s71
      %p83 = scmp.eq.s32.totalorder %s19, 1
      %p84 = por %p82, %p83
      %p86 = scmp.ne.s32.totalorder %s71, %s85
      %p87 = scmp.eq.s32.totalorder %s19, 0
      %p88 = por %p86, %p87
      %s90 = sadd.s32 %s89, 1
      %p93 = scmp.eq.s32.totalorder %s13, 1
      %p94 = scmp.ne.s32.totalorder %s89, %s91
      %p95 = scmp.eq.s32.totalorder %s13, 0
      %p96 = por %p94, %p95
      %p97 = scmp.ne.s32.totalorder %s89, %s91
      %p98 = scmp.eq.s32.totalorder %s18, 1
      %p99 = por %p97, %p98
      %p100 = scmp.ne.s32.totalorder %s91, %s92
      %p101 = scmp.eq.s32.totalorder %s18, 0
      %p102 = por %p100, %p101
      %p103 = scmp.ne.s32.totalorder %s91, %s92
      %p104 = scmp.eq.s32.totalorder %s19, 1
      %p105 = por %p103, %p104
      %p107 = scmp.ne.s32.totalorder %s92, %s106
      %p108 = scmp.eq.s32.totalorder %s19, 0
      %p109 = por %p107, %p108
      %s111 = sadd.s32 %s110, 1
      %p114 = scmp.eq.s32.totalorder %s13, 1
      %p115 = scmp.ne.s32.totalorder %s110, %s112
      %p116 = scmp.eq.s32.totalorder %s13, 0
      %p117 = por %p115, %p116
      %p118 = scmp.ne.s32.totalorder %s110, %s112
      %p119 = scmp.eq.s32.totalorder %s18, 1
      %p120 = por %p118, %p119
      %p121 = scmp.ne.s32.totalorder %s112, %s113
      %p122 = scmp.eq.s32.totalorder %s18, 0
      %p123 = por %p121, %p122
      %p124 = scmp.ne.s32.totalorder %s112, %s113
      %p125 = scmp.eq.s32.totalorder %s19, 1
      %p126 = por %p124, %p125
      %p128 = scmp.ne.s32.totalorder %s113, %s127
      %p129 = scmp.eq.s32.totalorder %s19, 0
      %p130 = por %p128, %p129
      %s132 = sadd.s32 %s131, 1
      %p135 = scmp.eq.s32.totalorder %s13, 1
      %p136 = scmp.ne.s32.totalorder %s131, %s133
      %p137 = scmp.eq.s32.totalorder %s13, 0
      %p138 = por %p136, %p137
      %p139 = scmp.ne.s32.totalorder %s131, %s133
      %p140 = scmp.eq.s32.totalorder %s18, 1
      %p141 = por %p139, %p140
      %p142 = scmp.ne.s32.totalorder %s133, %s134
      %p143 = scmp.eq.s32.totalorder %s18, 0
      %p144 = por %p142, %p143
      %p145 = scmp.ne.s32.totalorder %s133, %s134
      %p146 = scmp.eq.s32.totalorder %s19, 1
      %p147 = por %p145, %p146
      %p149 = scmp.ne.s32.totalorder %s134, %s148
      %p150 = scmp.eq.s32.totalorder %s19, 0
      %p151 = por %p149, %p150
      %s153 = sadd.s32 %s152, 1
      %p156 = scmp.eq.s32.totalorder %s13, 1
      %p157 = scmp.ne.s32.totalorder %s152, %s154
      %p158 = scmp.eq.s32.totalorder %s13, 0
      %p159 = por %p157, %p158
      %p160 = scmp.ne.s32.totalorder %s152, %s154
      %p161 = scmp.eq.s32.totalorder %s18, 1
      %p162 = por %p160, %p161
      %p163 = scmp.ne.s32.totalorder %s154, %s155
      %p164 = scmp.eq.s32.totalorder %s18, 0
      %p165 = por %p163, %p164
      %p166 = scmp.ne.s32.totalorder %s154, %s155
      %p167 = scmp.eq.s32.totalorder %s19, 1
      %p168 = por %p166, %p167
      %p170 = scmp.ne.s32.totalorder %s155, %s169
      %p171 = scmp.eq.s32.totalorder %s19, 0
      %p172 = por %p170, %p171
      %s173 = ssub.s32 %s13, %s20
      %p174 = scmp.eq.s32.totalorder %s173, 0
      %s176 = sadd.s32 %s175, 1
      %s177 = scalar_select %p174, %s175, %s176
      %p180 = pneg %p174
      %p181 = scmp.eq.s32.totalorder %s13, 1
      %p182 = por %p180, %p181
      %p183 = scmp.ne.s32.totalorder %s175, %s178
      %p184 = scmp.eq.s32.totalorder %s13, 0
      %p185 = por %p183, %p184
      %p186 = scmp.ne.s32.totalorder %s175, %s178
      %p187 = scmp.eq.s32.totalorder %s18, 1
      %p188 = por %p186, %p187
      %p189 = scmp.ne.s32.totalorder %s178, %s179
      %p190 = scmp.eq.s32.totalorder %s18, 0
      %p191 = por %p189, %p190
      %p192 = scmp.ne.s32.totalorder %s178, %s179
      %p193 = scmp.eq.s32.totalorder %s19, 1
      %p194 = por %p192, %p193
      %p196 = scmp.ne.s32.totalorder %s179, %s195
      %p197 = scmp.eq.s32.totalorder %s19, 0
      %p198 = por %p196, %p197
      %p199 = scmp.le.s32.totalorder 1, %s13
      %p200 = scmp.lt.s32.totalorder %s13, 3
      %p201 = pnand %p199, %p200
      %p202 = pneg %p201
      // Predicated region
      $region9: #{simple_segmentation_forward.1} parent=5 // pred_check
        _
      $region10: #{simple_segmentation_forward.1} parent=5 // pred_check_branch
        %204 = sbr.rel (%p201) target = $region12
      $region11: #{simple_segmentation_forward.1} parent=5 // pred_region
        %s205 = ssub.s32 %s13, 1
        // Predicated region
        $region13: #{simple_segmentation_forward.1} parent=11 // pred_check
          %p206 = pneg %p60
        $region14: #{simple_segmentation_forward.1} parent=11 // pred_check_branch
          %208 = sbr.rel (%p206) target = $region16
        $region15: #{simple_segmentation_forward.1} parent=11 // pred_region
          _
        $region16: #{simple_segmentation_forward.1} parent=11 // pred_fallthru
          _
        // Predicated region
        $region17: #{simple_segmentation_forward.1} parent=11 // pred_check
          %p209 = pneg %p81
        $region18: #{simple_segmentation_forward.1} parent=11 // pred_check_branch
          %211 = sbr.rel (%p209) target = $region20
        $region19: #{simple_segmentation_forward.1} parent=11 // pred_region
          _
        $region20: #{simple_segmentation_forward.1} parent=11 // pred_fallthru
          _
        // Predicated region
        $region21: #{simple_segmentation_forward.1} parent=11 // pred_check
          %p212 = pneg %p102
        $region22: #{simple_segmentation_forward.1} parent=11 // pred_check_branch
          %214 = sbr.rel (%p212) target = $region24
        $region23: #{simple_segmentation_forward.1} parent=11 // pred_region
          _
        $region24: #{simple_segmentation_forward.1} parent=11 // pred_fallthru
          _
        // Predicated region
        $region25: #{simple_segmentation_forward.1} parent=11 // pred_check
          %p215 = pneg %p123
        $region26: #{simple_segmentation_forward.1} parent=11 // pred_check_branch
          %217 = sbr.rel (%p215) target = $region28
        $region27: #{simple_segmentation_forward.1} parent=11 // pred_region
          _
        $region28: #{simple_segmentation_forward.1} parent=11 // pred_fallthru
          _
        // Predicated region
        $region29: #{simple_segmentation_forward.1} parent=11 // pred_check
          %p218 = pneg %p144
        $region30: #{simple_segmentation_forward.1} parent=11 // pred_check_branch
          %220 = sbr.rel (%p218) target = $region32
        $region31: #{simple_segmentation_forward.1} parent=11 // pred_region
          _
        $region32: #{simple_segmentation_forward.1} parent=11 // pred_fallthru
          _
        // Predicated region
        $region33: #{simple_segmentation_forward.1} parent=11 // pred_check
          %p221 = pneg %p165
        $region34: #{simple_segmentation_forward.1} parent=11 // pred_check_branch
          %223 = sbr.rel (%p221) target = $region36
        $region35: #{simple_segmentation_forward.1} parent=11 // pred_region
          _
        $region36: #{simple_segmentation_forward.1} parent=11 // pred_fallthru
          _
      $region12: #{simple_segmentation_forward.1} parent=5 // pred_fallthru
        _
      %p224 = scmp.lt.s32.totalorder %s13, 2
      // Predicated region
      $region37: #{simple_segmentation_forward.1} parent=5 // pred_check
        %p225 = pneg %p224
      $region38: #{simple_segmentation_forward.1} parent=5 // pred_check_branch
        %227 = sbr.rel (%p225) target = $region40
      $region39: #{simple_segmentation_forward.1} parent=5 // pred_region
        // Predicated region
        $region41: #{simple_segmentation_forward.1} parent=39 // pred_check
          %p228 = pneg %p33
        $region42: #{simple_segmentation_forward.1} parent=39 // pred_check_branch
          %230 = sbr.rel (%p228) target = $region44
        $region43: #{simple_segmentation_forward.1} parent=39 // pred_region
          %s231 = smul.u32 32, %s13
          %p232 = scmp.lt.s32.totalorder %s231, 63
          %s233 = scalar_select %p232, %s231, 63
          %s234 = smul.addr %s233, 4
          %s235 = scalar_lea.vmem %s0, %s234
          %s236 = smul.u32 32, %s13
        $region44: #{simple_segmentation_forward.1} parent=39 // pred_fallthru
          _
      $region40: #{simple_segmentation_forward.1} parent=5 // pred_fallthru
        _
      %p237 = scmp.le.s32.totalorder 1, %s13
      %p238 = scmp.lt.s32.totalorder %s13, 3
      %p239 = pnand %p237, %p238
      %p240 = pneg %p239
      // Predicated region
      $region45: #{simple_segmentation_forward.1} parent=5 // pred_check
        _
      $region46: #{simple_segmentation_forward.1} parent=5 // pred_check_branch
        %242 = sbr.rel (%p239) target = $region48
      $region47: #{simple_segmentation_forward.1} parent=5 // pred_region
        %s243 = ssub.s32 %s13, 1
        %s244 = smul.u32 32, %s18
        %p245 = scmp.lt.s32.totalorder %s244, 63
        %s246 = scalar_select %p245, %s244, 63
        %s247 = smul.addr %s246, 4
        %s248 = scalar_lea.vmem %s0, %s247
        %p249 = pneg %p39
        %p250 = pneg %p36
        %p251 = pneg %p60
        %p252 = pneg %p57
        %p253 = pneg %p81
        %p254 = pneg %p78
        %p255 = pneg %p102
        %p256 = pneg %p99
        %p257 = pneg %p123
        %p258 = pneg %p120
        %p259 = pneg %p144
        %p260 = pneg %p141
        %p261 = pneg %p165
        %p262 = pneg %p162
        %p263 = pneg %p191
        %p264 = pneg %p188
        %s265 = sand.u32 %s178, 1
        %s266 = sand.u32 %s178, 1
        %s267 = smul.addr %s266, 64
        %s268 = scalar_lea.vmem [#allocation2], %s267
        %s269 = smul.u32 32, %s18
        %p270 = scmp.lt.s32.totalorder %s269, 63
        %s271 = scalar_select %p270, %s269, 63
        %s272 = smul.addr %s271, 4
        %s273 = scalar_lea.vmem %s0, %s272
        %s274 = smul.u32 32, %s18
        %s275 = smul.u32 2, %s18
        %v277 = vld [vmem:[%s273] sm:$0xf]
        %v278 = vld [vmem:[%s273 + $0x4] sm:$0xf]
        %v279 = vld [vmem:[%s273 + $0x8] sm:$0xf]
        %v280 = vld [vmem:[%s273 + $0xc] sm:$0xf]
        %v281 = vld [vmem:[%s273 + $0x10] sm:$0xf]
        %v282 = vld [vmem:[%s273 + $0x14] sm:$0xf]
        %v283 = vld [vmem:[%s273 + $0x18] sm:$0xf]
        %v284 = vld [vmem:[%s273 + $0x1c] sm:$0xf]
        %v285 = vld [vmem:[%s273 + $0x20] sm:$0xf]
        %v286 = vld [vmem:[%s273 + $0x24] sm:$0xf]
        %v287 = vld [vmem:[%s273 + $0x28] sm:$0xf]
        %v288 = vld [vmem:[%s273 + $0x2c] sm:$0xf]
        %v289 = vld [vmem:[%s273 + $0x30] sm:$0xf]
        %v290 = vld [vmem:[%s273 + $0x34] sm:$0xf]
        %v291 = vld [vmem:[%s273 + $0x38] sm:$0xf]
        %v292 = vld [vmem:[%s273 + $0x3c] sm:$0xf]
        %v293 = vld [vmem:[%s273 + $0x40] sm:$0xf]
        %v294 = vld [vmem:[%s273 + $0x44] sm:$0xf]
        %v295 = vld [vmem:[%s273 + $0x48] sm:$0xf]
        %v296 = vld [vmem:[%s273 + $0x4c] sm:$0xf]
        %v297 = vld [vmem:[%s273 + $0x50] sm:$0xf]
        %v298 = vld [vmem:[%s273 + $0x54] sm:$0xf]
        %v299 = vld [vmem:[%s273 + $0x58] sm:$0xf]
        %v300 = vld [vmem:[%s273 + $0x5c] sm:$0xf]
        %v301 = vld [vmem:[%s273 + $0x60] sm:$0xf]
        %v302 = vld [vmem:[%s273 + $0x64] sm:$0xf]
        %v303 = vld [vmem:[%s273 + $0x68] sm:$0xf]
        %v304 = vld [vmem:[%s273 + $0x6c] sm:$0xf]
        %v305 = vld [vmem:[%s273 + $0x70] sm:$0xf]
        %v306 = vld [vmem:[%s273 + $0x74] sm:$0xf]
        %v307 = vld [vmem:[%s273 + $0x78] sm:$0xf]
        %v308 = vld [vmem:[%s273 + $0x7c] sm:$0xf]
        %v309 = vld [vmem:[%s1] sm:$0x3]
        %v310 = vld [vmem:[%s2] sm:$0x1]
        %v312 = vlaneseq
        %v313 = vshrl.u32 %v312, 7
        %v314 = vsub.s32 0, %v313
        %v315 = vrot.slane %v310, %v314
        %v349 = vunpack.c.l.b16 %v277
        %v350 = vunpack.c.l.b16 %v278
        %v351 = vunpack.c.l.b16 %v279
        %v352 = vunpack.c.l.b16 %v280
        %v353 = vunpack.c.l.b16 %v281
        %v354 = vunpack.c.l.b16 %v282
        %v355 = vunpack.c.l.b16 %v283
        %v356 = vunpack.c.l.b16 %v284
        %v357 = vunpack.c.l.b16 %v285
        %v358 = vunpack.c.l.b16 %v286
        %v359 = vunpack.c.l.b16 %v287
        %v360 = vunpack.c.l.b16 %v288
        %v361 = vunpack.c.l.b16 %v289
        %v362 = vunpack.c.l.b16 %v290
        %v363 = vunpack.c.l.b16 %v291
        %v364 = vunpack.c.l.b16 %v292
        %v365 = vunpack.c.l.b16 %v293
        %v366 = vunpack.c.l.b16 %v294
        %v367 = vunpack.c.l.b16 %v295
        %v368 = vunpack.c.l.b16 %v296
        %v369 = vunpack.c.l.b16 %v297
        %v370 = vunpack.c.l.b16 %v298
        %v371 = vunpack.c.l.b16 %v299
        %v372 = vunpack.c.l.b16 %v300
        %v373 = vunpack.c.l.b16 %v301
        %v374 = vunpack.c.l.b16 %v302
        %v375 = vunpack.c.l.b16 %v303
        %v376 = vunpack.c.l.b16 %v304
        %v377 = vunpack.c.l.b16 %v305
        %v378 = vunpack.c.l.b16 %v306
        %v379 = vunpack.c.l.b16 %v307
        %v380 = vunpack.c.l.b16 %v308
        %v381 = vpack.c.b16 %v350, %v349
        %v382 = vpack.c.b16 %v352, %v351
        %v383 = vpack.c.b16 %v354, %v353
        %v384 = vpack.c.b16 %v356, %v355
        %v385 = vpack.c.b16 %v358, %v357
        %v386 = vpack.c.b16 %v360, %v359
        %v387 = vpack.c.b16 %v362, %v361
        %v388 = vpack.c.b16 %v364, %v363
        %v389 = vpack.c.b16 %v366, %v365
        %v390 = vpack.c.b16 %v368, %v367
        %v391 = vpack.c.b16 %v370, %v369
        %v392 = vpack.c.b16 %v372, %v371
        %v393 = vpack.c.b16 %v374, %v373
        %v394 = vpack.c.b16 %v376, %v375
        %v395 = vpack.c.b16 %v378, %v377
        %v396 = vpack.c.b16 %v380, %v379
        %vm397 = vcmask 31744
        %v399 = vsel %vm397, %v381, 0
        %v402 = vsel %vm397, %v382, 0
        %v405 = vsel %vm397, %v383, 0
        %v408 = vsel %vm397, %v384, 0
        %v411 = vsel %vm397, %v385, 0
        %v414 = vsel %vm397, %v386, 0
        %v417 = vsel %vm397, %v387, 0
        %v420 = vsel %vm397, %v388, 0
        %v423 = vsel %vm397, %v389, 0
        %v426 = vsel %vm397, %v390, 0
        %v429 = vsel %vm397, %v391, 0
        %v432 = vsel %vm397, %v392, 0
        %v435 = vsel %vm397, %v393, 0
        %v438 = vsel %vm397, %v394, 0
        %v441 = vsel %vm397, %v395, 0
        %v444 = vsel %vm397, %v396, 0
        %vm446 = vcmask 1041408
        %v448 = vsel %vm446, %v309, 0
        %450 = vmatprep.subr.bf16.mxu0 0
        %451 = vmatpush1.bf16.msra.mxu0 0
        %452 = vmatprep.subr.bf16.mxu0 0
        %453 = vmatpush1.bf16.msra.mxu0 0
        %454 = vmatprep.subr.bf16.mxu0 0
        %455 = vmatpush1.bf16.msra.mxu0 0
        %456 = vmatprep.subr.bf16.mxu0 0
        %457 = vmatpush1.bf16.msra.mxu0 0
        %458 = vmatprep.subr.bf16.mxu0 0
        %459 = vmatpush1.bf16.msra.mxu0 0
        %460 = vmatprep.subr.bf16.mxu0 0
        %461 = vmatpush1.bf16.msra.mxu0 0
        %462 = vmatprep.subr.bf16.mxu0 0
        %463 = vmatpush1.bf16.msra.mxu0 0
        %464 = vmatprep.subr.bf16.mxu0 0
        %465 = vmatpush1.bf16.msra.mxu0 %v448
        %466 = vmatprep.subr.bf16.mxu0 0
        %467 = vmatpush2.bf16.msra.mxu0 0
        %468 = vmatprep.subr.bf16.mxu0 0
        %469 = vmatpush2.bf16.msra.mxu0 0
        %470 = vmatprep.subr.bf16.mxu0 0
        %471 = vmatpush2.bf16.msra.mxu0 0
        %472 = vmatprep.subr.bf16.mxu0 0
        %473 = vmatpush2.bf16.msra.mxu0 0
        %474 = vmatprep.subr.bf16.mxu0 0
        %475 = vmatpush2.bf16.msra.mxu0 0
        %476 = vmatprep.subr.bf16.mxu0 0
        %477 = vmatpush2.bf16.msra.mxu0 0
        %478 = vmatprep.subr.bf16.mxu0 0
        %479 = vmatpush2.bf16.msra.mxu0 0
        %480 = vmatprep.subr.bf16.mxu0 0
        %481 = vmatpush2.bf16.msra.mxu0 0
        %482 = vmatprep.mubr.bf16.mxu0 0
        %483 = vmatmul.mubr.bf16.gmra.mxu0 %v399
        %v484 = vpop.f32.mrf.mxu0
        %v485 = vadd.f32 %v315, %v484
        %v486 = vpop.f32.mrf.mxu0
        %v487 = vpop.f32.mrf.mxu0
        %v488 = vadd.f32 %v315, %v487
        %v489 = vpop.f32.mrf.mxu0
        %490 = vmatprep.mubr.bf16.mxu0 0
        %491 = vmatmul.mubr.bf16.gmra.mxu0 %v402
        %v492 = vpop.f32.mrf.mxu0
        %v493 = vadd.f32 %v315, %v492
        %v494 = vpop.f32.mrf.mxu0
        %v495 = vpop.f32.mrf.mxu0
        %v496 = vadd.f32 %v315, %v495
        %v497 = vpop.f32.mrf.mxu0
        %498 = vmatprep.mubr.bf16.mxu0 0
        %499 = vmatmul.mubr.bf16.gmra.mxu0 %v405
        %v500 = vpop.f32.mrf.mxu0
        %v501 = vadd.f32 %v315, %v500
        %v502 = vpop.f32.mrf.mxu0
        %v503 = vpop.f32.mrf.mxu0
        %v504 = vadd.f32 %v315, %v503
        %v505 = vpop.f32.mrf.mxu0
        %506 = vmatprep.mubr.bf16.mxu0 0
        %507 = vmatmul.mubr.bf16.gmra.mxu0 %v408
        %v508 = vpop.f32.mrf.mxu0
        %v509 = vadd.f32 %v315, %v508
        %v510 = vpop.f32.mrf.mxu0
        %v511 = vpop.f32.mrf.mxu0
        %v512 = vadd.f32 %v315, %v511
        %v513 = vpop.f32.mrf.mxu0
        %514 = vmatprep.mubr.bf16.mxu0 0
        %515 = vmatmul.mubr.bf16.gmra.mxu0 %v411
        %v516 = vpop.f32.mrf.mxu0
        %v517 = vadd.f32 %v315, %v516
        %v518 = vpop.f32.mrf.mxu0
        %v519 = vpop.f32.mrf.mxu0
        %v520 = vadd.f32 %v315, %v519
        %v521 = vpop.f32.mrf.mxu0
        %522 = vmatprep.mubr.bf16.mxu0 0
        %523 = vmatmul.mubr.bf16.gmra.mxu0 %v414
        %v524 = vpop.f32.mrf.mxu0
        %v525 = vadd.f32 %v315, %v524
        %v526 = vpop.f32.mrf.mxu0
        %v527 = vpop.f32.mrf.mxu0
        %v528 = vadd.f32 %v315, %v527
        %v529 = vpop.f32.mrf.mxu0
        %530 = vmatprep.mubr.bf16.mxu0 0
        %531 = vmatmul.mubr.bf16.gmra.mxu0 %v417
        %v532 = vpop.f32.mrf.mxu0
        %v533 = vadd.f32 %v315, %v532
        %v534 = vpop.f32.mrf.mxu0
        %v535 = vpop.f32.mrf.mxu0
        %v536 = vadd.f32 %v315, %v535
        %v537 = vpop.f32.mrf.mxu0
        %538 = vmatprep.mubr.bf16.mxu0 0
        %539 = vmatmul.mubr.bf16.gmra.mxu0 %v420
        %v540 = vpop.f32.mrf.mxu0
        %v541 = vadd.f32 %v315, %v540
        %v542 = vpop.f32.mrf.mxu0
        %v543 = vpop.f32.mrf.mxu0
        %v544 = vadd.f32 %v315, %v543
        %v545 = vpop.f32.mrf.mxu0
        %546 = vmatprep.mubr.bf16.mxu0 0
        %547 = vmatmul.mubr.bf16.gmra.mxu0 %v423
        %v548 = vpop.f32.mrf.mxu0
        %v549 = vadd.f32 %v315, %v548
        %v550 = vpop.f32.mrf.mxu0
        %v551 = vpop.f32.mrf.mxu0
        %v552 = vadd.f32 %v315, %v551
        %v553 = vpop.f32.mrf.mxu0
        %554 = vmatprep.mubr.bf16.mxu0 0
        %555 = vmatmul.mubr.bf16.gmra.mxu0 %v426
        %v556 = vpop.f32.mrf.mxu0
        %v557 = vadd.f32 %v315, %v556
        %v558 = vpop.f32.mrf.mxu0
        %v559 = vpop.f32.mrf.mxu0
        %v560 = vadd.f32 %v315, %v559
        %v561 = vpop.f32.mrf.mxu0
        %562 = vmatprep.mubr.bf16.mxu0 0
        %563 = vmatmul.mubr.bf16.gmra.mxu0 %v429
        %v564 = vpop.f32.mrf.mxu0
        %v565 = vadd.f32 %v315, %v564
        %v566 = vpop.f32.mrf.mxu0
        %v567 = vpop.f32.mrf.mxu0
        %v568 = vadd.f32 %v315, %v567
        %v569 = vpop.f32.mrf.mxu0
        %570 = vmatprep.mubr.bf16.mxu0 0
        %571 = vmatmul.mubr.bf16.gmra.mxu0 %v432
        %v572 = vpop.f32.mrf.mxu0
        %v573 = vadd.f32 %v315, %v572
        %v574 = vpop.f32.mrf.mxu0
        %v575 = vpop.f32.mrf.mxu0
        %v576 = vadd.f32 %v315, %v575
        %v577 = vpop.f32.mrf.mxu0
        %578 = vmatprep.mubr.bf16.mxu0 0
        %579 = vmatmul.mubr.bf16.gmra.mxu0 %v435
        %v580 = vpop.f32.mrf.mxu0
        %v581 = vadd.f32 %v315, %v580
        %v582 = vpop.f32.mrf.mxu0
        %v583 = vpop.f32.mrf.mxu0
        %v584 = vadd.f32 %v315, %v583
        %v585 = vpop.f32.mrf.mxu0
        %586 = vmatprep.mubr.bf16.mxu0 0
        %587 = vmatmul.mubr.bf16.gmra.mxu0 %v438
        %v588 = vpop.f32.mrf.mxu0
        %v589 = vadd.f32 %v315, %v588
        %v590 = vpop.f32.mrf.mxu0
        %v591 = vpop.f32.mrf.mxu0
        %v592 = vadd.f32 %v315, %v591
        %v593 = vpop.f32.mrf.mxu0
        %594 = vmatprep.mubr.bf16.mxu0 0
        %595 = vmatmul.mubr.bf16.gmra.mxu0 %v441
        %v596 = vpop.f32.mrf.mxu0
        %v597 = vadd.f32 %v315, %v596
        %v598 = vpop.f32.mrf.mxu0
        %v599 = vpop.f32.mrf.mxu0
        %v600 = vadd.f32 %v315, %v599
        %v601 = vpop.f32.mrf.mxu0
        %602 = vmatprep.mubr.bf16.mxu0 0
        %603 = vmatmul.mubr.bf16.gmra.mxu0 %v444
        %v604 = vpop.f32.mrf.mxu0
        %v605 = vadd.f32 %v315, %v604
        %v606 = vpop.f32.mrf.mxu0
        %v607 = vpop.f32.mrf.mxu0
        %v608 = vadd.f32 %v315, %v607
        %v609 = vpop.f32.mrf.mxu0
        %610 = vdwg.mxu0
        %v611 = vmax.f32 %v485, 0.0
        %v612 = vmax.f32 %v488, 0.0
        %v613 = vmax.f32 %v493, 0.0
        %v614 = vmax.f32 %v496, 0.0
        %v615 = vmax.f32 %v501, 0.0
        %v616 = vmax.f32 %v504, 0.0
        %v617 = vmax.f32 %v509, 0.0
        %v618 = vmax.f32 %v512, 0.0
        %v619 = vmax.f32 %v517, 0.0
        %v620 = vmax.f32 %v520, 0.0
        %v621 = vmax.f32 %v525, 0.0
        %v622 = vmax.f32 %v528, 0.0
        %v623 = vmax.f32 %v533, 0.0
        %v624 = vmax.f32 %v536, 0.0
        %v625 = vmax.f32 %v541, 0.0
        %v626 = vmax.f32 %v544, 0.0
        %v627 = vmax.f32 %v549, 0.0
        %v628 = vmax.f32 %v552, 0.0
        %v629 = vmax.f32 %v557, 0.0
        %v630 = vmax.f32 %v560, 0.0
        %v631 = vmax.f32 %v565, 0.0
        %v632 = vmax.f32 %v568, 0.0
        %v633 = vmax.f32 %v573, 0.0
        %v634 = vmax.f32 %v576, 0.0
        %v635 = vmax.f32 %v581, 0.0
        %v636 = vmax.f32 %v584, 0.0
        %v637 = vmax.f32 %v589, 0.0
        %v638 = vmax.f32 %v592, 0.0
        %v639 = vmax.f32 %v597, 0.0
        %v640 = vmax.f32 %v600, 0.0
        %v641 = vmax.f32 %v605, 0.0
        %v642 = vmax.f32 %v608, 0.0
        %v643 = vpack.c.bf16 %v612, %v611
        %v644 = vpack.c.bf16 %v614, %v613
        %v645 = vpack.c.bf16 %v616, %v615
        %v646 = vpack.c.bf16 %v618, %v617
        %v647 = vpack.c.bf16 %v620, %v619
        %v648 = vpack.c.bf16 %v622, %v621
        %v649 = vpack.c.bf16 %v624, %v623
        %v650 = vpack.c.bf16 %v626, %v625
        %v651 = vpack.c.bf16 %v628, %v627
        %v652 = vpack.c.bf16 %v630, %v629
        %v653 = vpack.c.bf16 %v632, %v631
        %v654 = vpack.c.bf16 %v634, %v633
        %v655 = vpack.c.bf16 %v636, %v635
        %v656 = vpack.c.bf16 %v638, %v637
        %v657 = vpack.c.bf16 %v640, %v639
        %v658 = vpack.c.bf16 %v642, %v641
        %v659 = vld [vmem:[%s3] sm:$0xf]
        %v660 = vld [vmem:[%s3 + $0x4] sm:$0xf]
        %v661 = vld [vmem:[%s4] sm:$0x1]
        %v663 = vlaneseq
        %v664 = vshrl.u32 %v663, 7
        %v665 = vsub.s32 0, %v664
        %v666 = vrot.slane %v661, %v665
        %v670 = vunpack.c.l.b16 %v659
        %v671 = vunpack.c.l.b16 %v660
        %v672 = vpack.c.b16 %v671, %v670
        %vm674 = vcmask 130048
        %v676 = vsel %vm674, %v643, 0
        %v679 = vsel %vm674, %v644, 0
        %v682 = vsel %vm674, %v645, 0
        %v685 = vsel %vm674, %v646, 0
        %v688 = vsel %vm674, %v647, 0
        %v691 = vsel %vm674, %v648, 0
        %v694 = vsel %vm674, %v649, 0
        %v697 = vsel %vm674, %v650, 0
        %v700 = vsel %vm674, %v651, 0
        %v703 = vsel %vm674, %v652, 0
        %v706 = vsel %vm674, %v653, 0
        %v709 = vsel %vm674, %v654, 0
        %v712 = vsel %vm674, %v655, 0
        %v715 = vsel %vm674, %v656, 0
        %v718 = vsel %vm674, %v657, 0
        %v721 = vsel %vm674, %v658, 0
        %723 = vmatprep.subr.bf16.mxu0 0
        %724 = vmatpush1.bf16.msra.mxu0 0
        %725 = vmatprep.subr.bf16.mxu0 0
        %726 = vmatpush1.bf16.msra.mxu0 0
        %727 = vmatprep.subr.bf16.mxu0 0
        %728 = vmatpush1.bf16.msra.mxu0 0
        %729 = vmatprep.subr.bf16.mxu0 0
        %730 = vmatpush1.bf16.msra.mxu0 0
        %731 = vmatprep.subr.bf16.mxu0 0
        %732 = vmatpush1.bf16.msra.mxu0 0
        %733 = vmatprep.subr.bf16.mxu0 0
        %734 = vmatpush1.bf16.msra.mxu0 0
        %735 = vmatprep.subr.bf16.mxu0 0
        %736 = vmatpush1.bf16.msra.mxu0 0
        %737 = vmatprep.subr.bf16.mxu0 0
        %738 = vmatpush1.bf16.msra.mxu0 %v672
        %739 = vmatprep.subr.bf16.mxu0 0
        %740 = vmatpush2.bf16.msra.mxu0 0
        %741 = vmatprep.subr.bf16.mxu0 0
        %742 = vmatpush2.bf16.msra.mxu0 0
        %743 = vmatprep.subr.bf16.mxu0 0
        %744 = vmatpush2.bf16.msra.mxu0 0
        %745 = vmatprep.subr.bf16.mxu0 0
        %746 = vmatpush2.bf16.msra.mxu0 0
        %747 = vmatprep.subr.bf16.mxu0 0
        %748 = vmatpush2.bf16.msra.mxu0 0
        %749 = vmatprep.subr.bf16.mxu0 0
        %750 = vmatpush2.bf16.msra.mxu0 0
        %751 = vmatprep.subr.bf16.mxu0 0
        %752 = vmatpush2.bf16.msra.mxu0 0
        %753 = vmatprep.subr.bf16.mxu0 0
        %754 = vmatpush2.bf16.msra.mxu0 0
        %755 = vmatprep.mubr.bf16.mxu0 0
        %756 = vmatmul.mubr.bf16.gmra.mxu0 %v676
        %v757 = vpop.f32.mrf.mxu0
        %v758 = vadd.f32 %v666, %v757
        %v759 = vpop.f32.mrf.mxu0
        %v760 = vpop.f32.mrf.mxu0
        %v761 = vadd.f32 %v666, %v760
        %v762 = vpop.f32.mrf.mxu0
        %763 = vmatprep.mubr.bf16.mxu0 0
        %764 = vmatmul.mubr.bf16.gmra.mxu0 %v679
        %v765 = vpop.f32.mrf.mxu0
        %v766 = vadd.f32 %v666, %v765
        %v767 = vpop.f32.mrf.mxu0
        %v768 = vpop.f32.mrf.mxu0
        %v769 = vadd.f32 %v666, %v768
        %v770 = vpop.f32.mrf.mxu0
        %771 = vmatprep.mubr.bf16.mxu0 0
        %772 = vmatmul.mubr.bf16.gmra.mxu0 %v682
        %v773 = vpop.f32.mrf.mxu0
        %v774 = vadd.f32 %v666, %v773
        %v775 = vpop.f32.mrf.mxu0
        %v776 = vpop.f32.mrf.mxu0
        %v777 = vadd.f32 %v666, %v776
        %v778 = vpop.f32.mrf.mxu0
        %779 = vmatprep.mubr.bf16.mxu0 0
        %780 = vmatmul.mubr.bf16.gmra.mxu0 %v685
        %v781 = vpop.f32.mrf.mxu0
        %v782 = vadd.f32 %v666, %v781
        %v783 = vpop.f32.mrf.mxu0
        %v784 = vpop.f32.mrf.mxu0
        %v785 = vadd.f32 %v666, %v784
        %v786 = vpop.f32.mrf.mxu0
        %787 = vmatprep.mubr.bf16.mxu0 0
        %788 = vmatmul.mubr.bf16.gmra.mxu0 %v688
        %v789 = vpop.f32.mrf.mxu0
        %v790 = vadd.f32 %v666, %v789
        %v791 = vpop.f32.mrf.mxu0
        %v792 = vpop.f32.mrf.mxu0
        %v793 = vadd.f32 %v666, %v792
        %v794 = vpop.f32.mrf.mxu0
        %795 = vmatprep.mubr.bf16.mxu0 0
        %796 = vmatmul.mubr.bf16.gmra.mxu0 %v691
        %v797 = vpop.f32.mrf.mxu0
        %v798 = vadd.f32 %v666, %v797
        %v799 = vpop.f32.mrf.mxu0
        %v800 = vpop.f32.mrf.mxu0
        %v801 = vadd.f32 %v666, %v800
        %v802 = vpop.f32.mrf.mxu0
        %803 = vmatprep.mubr.bf16.mxu0 0
        %804 = vmatmul.mubr.bf16.gmra.mxu0 %v694
        %v805 = vpop.f32.mrf.mxu0
        %v806 = vadd.f32 %v666, %v805
        %v807 = vpop.f32.mrf.mxu0
        %v808 = vpop.f32.mrf.mxu0
        %v809 = vadd.f32 %v666, %v808
        %v810 = vpop.f32.mrf.mxu0
        %811 = vmatprep.mubr.bf16.mxu0 0
        %812 = vmatmul.mubr.bf16.gmra.mxu0 %v697
        %v813 = vpop.f32.mrf.mxu0
        %v814 = vadd.f32 %v666, %v813
        %v815 = vpop.f32.mrf.mxu0
        %v816 = vpop.f32.mrf.mxu0
        %v817 = vadd.f32 %v666, %v816
        %v818 = vpop.f32.mrf.mxu0
        %819 = vmatprep.mubr.bf16.mxu0 0
        %820 = vmatmul.mubr.bf16.gmra.mxu0 %v700
        %v821 = vpop.f32.mrf.mxu0
        %v822 = vadd.f32 %v666, %v821
        %v823 = vpop.f32.mrf.mxu0
        %v824 = vpop.f32.mrf.mxu0
        %v825 = vadd.f32 %v666, %v824
        %v826 = vpop.f32.mrf.mxu0
        %827 = vmatprep.mubr.bf16.mxu0 0
        %828 = vmatmul.mubr.bf16.gmra.mxu0 %v703
        %v829 = vpop.f32.mrf.mxu0
        %v830 = vadd.f32 %v666, %v829
        %v831 = vpop.f32.mrf.mxu0
        %v832 = vpop.f32.mrf.mxu0
        %v833 = vadd.f32 %v666, %v832
        %v834 = vpop.f32.mrf.mxu0
        %835 = vmatprep.mubr.bf16.mxu0 0
        %836 = vmatmul.mubr.bf16.gmra.mxu0 %v706
        %v837 = vpop.f32.mrf.mxu0
        %v838 = vadd.f32 %v666, %v837
        %v839 = vpop.f32.mrf.mxu0
        %v840 = vpop.f32.mrf.mxu0
        %v841 = vadd.f32 %v666, %v840
        %v842 = vpop.f32.mrf.mxu0
        %843 = vmatprep.mubr.bf16.mxu0 0
        %844 = vmatmul.mubr.bf16.gmra.mxu0 %v709
        %v845 = vpop.f32.mrf.mxu0
        %v846 = vadd.f32 %v666, %v845
        %v847 = vpop.f32.mrf.mxu0
        %v848 = vpop.f32.mrf.mxu0
        %v849 = vadd.f32 %v666, %v848
        %v850 = vpop.f32.mrf.mxu0
        %851 = vmatprep.mubr.bf16.mxu0 0
        %852 = vmatmul.mubr.bf16.gmra.mxu0 %v712
        %v853 = vpop.f32.mrf.mxu0
        %v854 = vadd.f32 %v666, %v853
        %v855 = vpop.f32.mrf.mxu0
        %v856 = vpop.f32.mrf.mxu0
        %v857 = vadd.f32 %v666, %v856
        %v858 = vpop.f32.mrf.mxu0
        %859 = vmatprep.mubr.bf16.mxu0 0
        %860 = vmatmul.mubr.bf16.gmra.mxu0 %v715
        %v861 = vpop.f32.mrf.mxu0
        %v862 = vadd.f32 %v666, %v861
        %v863 = vpop.f32.mrf.mxu0
        %v864 = vpop.f32.mrf.mxu0
        %v865 = vadd.f32 %v666, %v864
        %v866 = vpop.f32.mrf.mxu0
        %867 = vmatprep.mubr.bf16.mxu0 0
        %868 = vmatmul.mubr.bf16.gmra.mxu0 %v718
        %v869 = vpop.f32.mrf.mxu0
        %v870 = vadd.f32 %v666, %v869
        %v871 = vpop.f32.mrf.mxu0
        %v872 = vpop.f32.mrf.mxu0
        %v873 = vadd.f32 %v666, %v872
        %v874 = vpop.f32.mrf.mxu0
        %875 = vmatprep.mubr.bf16.mxu0 0
        %876 = vmatmul.mubr.bf16.gmra.mxu0 %v721
        %v877 = vpop.f32.mrf.mxu0
        %v878 = vadd.f32 %v666, %v877
        %v879 = vpop.f32.mrf.mxu0
        %v880 = vpop.f32.mrf.mxu0
        %v881 = vadd.f32 %v666, %v880
        %v882 = vpop.f32.mrf.mxu0
        %883 = vdwg.mxu0
        %v884 = vmax.f32 %v758, 0.0
        %v885 = vmax.f32 %v761, 0.0
        %v886 = vmax.f32 %v766, 0.0
        %v887 = vmax.f32 %v769, 0.0
        %v888 = vmax.f32 %v774, 0.0
        %v889 = vmax.f32 %v777, 0.0
        %v890 = vmax.f32 %v782, 0.0
        %v891 = vmax.f32 %v785, 0.0
        %v892 = vmax.f32 %v790, 0.0
        %v893 = vmax.f32 %v793, 0.0
        %v894 = vmax.f32 %v798, 0.0
        %v895 = vmax.f32 %v801, 0.0
        %v896 = vmax.f32 %v806, 0.0
        %v897 = vmax.f32 %v809, 0.0
        %v898 = vmax.f32 %v814, 0.0
        %v899 = vmax.f32 %v817, 0.0
        %v900 = vmax.f32 %v822, 0.0
        %v901 = vmax.f32 %v825, 0.0
        %v902 = vmax.f32 %v830, 0.0
        %v903 = vmax.f32 %v833, 0.0
        %v904 = vmax.f32 %v838, 0.0
        %v905 = vmax.f32 %v841, 0.0
        %v906 = vmax.f32 %v846, 0.0
        %v907 = vmax.f32 %v849, 0.0
        %v908 = vmax.f32 %v854, 0.0
        %v909 = vmax.f32 %v857, 0.0
        %v910 = vmax.f32 %v862, 0.0
        %v911 = vmax.f32 %v865, 0.0
        %v912 = vmax.f32 %v870, 0.0
        %v913 = vmax.f32 %v873, 0.0
        %v914 = vmax.f32 %v878, 0.0
        %v915 = vmax.f32 %v881, 0.0
        %v916 = vpack.c.bf16 %v885, %v884
        %v917 = vpack.c.bf16 %v887, %v886
        %v918 = vpack.c.bf16 %v889, %v888
        %v919 = vpack.c.bf16 %v891, %v890
        %v920 = vpack.c.bf16 %v893, %v892
        %v921 = vpack.c.bf16 %v895, %v894
        %v922 = vpack.c.bf16 %v897, %v896
        %v923 = vpack.c.bf16 %v899, %v898
        %v924 = vpack.c.bf16 %v901, %v900
        %v925 = vpack.c.bf16 %v903, %v902
        %v926 = vpack.c.bf16 %v905, %v904
        %v927 = vpack.c.bf16 %v907, %v906
        %v928 = vpack.c.bf16 %v909, %v908
        %v929 = vpack.c.bf16 %v911, %v910
        %v930 = vpack.c.bf16 %v913, %v912
        %v931 = vpack.c.bf16 %v915, %v914
        %v932 = vld [vmem:[%s5] sm:$0xf]
        %v933 = vld [vmem:[%s5 + $0x4] sm:$0xf]
        %v934 = vld [vmem:[%s5 + $0x8] sm:$0xf]
        %v935 = vld [vmem:[%s5 + $0xc] sm:$0xf]
        %v936 = vld [vmem:[%s6] sm:$0x1]
        %v938 = vlaneseq
        %v939 = vshrl.u32 %v938, 7
        %v940 = vsub.s32 0, %v939
        %v941 = vrot.slane %v936, %v940
        %v947 = vunpack.c.l.b16 %v932
        %v948 = vunpack.c.l.b16 %v933
        %v949 = vunpack.c.l.b16 %v934
        %v950 = vunpack.c.l.b16 %v935
        %v951 = vpack.c.b16 %v948, %v947
        %v952 = vpack.c.b16 %v950, %v949
        %vm955 = vcmask 261120
        %v957 = vsel %vm955, %v916, 0
        %v960 = vsel %vm955, %v917, 0
        %v963 = vsel %vm955, %v918, 0
        %v966 = vsel %vm955, %v919, 0
        %v969 = vsel %vm955, %v920, 0
        %v972 = vsel %vm955, %v921, 0
        %v975 = vsel %vm955, %v922, 0
        %v978 = vsel %vm955, %v923, 0
        %v981 = vsel %vm955, %v924, 0
        %v984 = vsel %vm955, %v925, 0
        %v987 = vsel %vm955, %v926, 0
        %v990 = vsel %vm955, %v927, 0
        %v993 = vsel %vm955, %v928, 0
        %v996 = vsel %vm955, %v929, 0
        %v999 = vsel %vm955, %v930, 0
        %v1002 = vsel %vm955, %v931, 0
        %1004 = vmatprep.subr.bf16.mxu0 0
        %1005 = vmatpush1.bf16.msra.mxu0 0
        %1006 = vmatprep.subr.bf16.mxu0 0
        %1007 = vmatpush1.bf16.msra.mxu0 0
        %1008 = vmatprep.subr.bf16.mxu0 0
        %1009 = vmatpush1.bf16.msra.mxu0 0
        %1010 = vmatprep.subr.bf16.mxu0 0
        %1011 = vmatpush1.bf16.msra.mxu0 0
        %1012 = vmatprep.subr.bf16.mxu0 0
        %1013 = vmatpush1.bf16.msra.mxu0 0
        %1014 = vmatprep.subr.bf16.mxu0 0
        %1015 = vmatpush1.bf16.msra.mxu0 0
        %1016 = vmatprep.subr.bf16.mxu0 0
        %1017 = vmatpush1.bf16.msra.mxu0 %v952
        %1018 = vmatprep.subr.bf16.mxu0 0
        %1019 = vmatpush1.bf16.msra.mxu0 %v951
        %1020 = vmatprep.subr.bf16.mxu0 0
        %1021 = vmatpush2.bf16.msra.mxu0 0
        %1022 = vmatprep.subr.bf16.mxu0 0
        %1023 = vmatpush2.bf16.msra.mxu0 0
        %1024 = vmatprep.subr.bf16.mxu0 0
        %1025 = vmatpush2.bf16.msra.mxu0 0
        %1026 = vmatprep.subr.bf16.mxu0 0
        %1027 = vmatpush2.bf16.msra.mxu0 0
        %1028 = vmatprep.subr.bf16.mxu0 0
        %1029 = vmatpush2.bf16.msra.mxu0 0
        %1030 = vmatprep.subr.bf16.mxu0 0
        %1031 = vmatpush2.bf16.msra.mxu0 0
        %1032 = vmatprep.subr.bf16.mxu0 0
        %1033 = vmatpush2.bf16.msra.mxu0 0
        %1034 = vmatprep.subr.bf16.mxu0 0
        %1035 = vmatpush2.bf16.msra.mxu0 0
        %1036 = vmatprep.mubr.bf16.mxu0 0
        %1037 = vmatmul.mubr.bf16.gmra.mxu0 %v957
        %v1038 = vpop.f32.mrf.mxu0
        %v1039 = vadd.f32 %v941, %v1038
        %v1040 = vpop.f32.mrf.mxu0
        %v1041 = vpop.f32.mrf.mxu0
        %v1042 = vadd.f32 %v941, %v1041
        %v1043 = vpop.f32.mrf.mxu0
        %1044 = vmatprep.mubr.bf16.mxu0 0
        %1045 = vmatmul.mubr.bf16.gmra.mxu0 %v960
        %v1046 = vpop.f32.mrf.mxu0
        %v1047 = vadd.f32 %v941, %v1046
        %v1048 = vpop.f32.mrf.mxu0
        %v1049 = vpop.f32.mrf.mxu0
        %v1050 = vadd.f32 %v941, %v1049
        %v1051 = vpop.f32.mrf.mxu0
        %1052 = vmatprep.mubr.bf16.mxu0 0
        %1053 = vmatmul.mubr.bf16.gmra.mxu0 %v963
        %v1054 = vpop.f32.mrf.mxu0
        %v1055 = vadd.f32 %v941, %v1054
        %v1056 = vpop.f32.mrf.mxu0
        %v1057 = vpop.f32.mrf.mxu0
        %v1058 = vadd.f32 %v941, %v1057
        %v1059 = vpop.f32.mrf.mxu0
        %1060 = vmatprep.mubr.bf16.mxu0 0
        %1061 = vmatmul.mubr.bf16.gmra.mxu0 %v966
        %v1062 = vpop.f32.mrf.mxu0
        %v1063 = vadd.f32 %v941, %v1062
        %v1064 = vpop.f32.mrf.mxu0
        %v1065 = vpop.f32.mrf.mxu0
        %v1066 = vadd.f32 %v941, %v1065
        %v1067 = vpop.f32.mrf.mxu0
        %1068 = vmatprep.mubr.bf16.mxu0 0
        %1069 = vmatmul.mubr.bf16.gmra.mxu0 %v969
        %v1070 = vpop.f32.mrf.mxu0
        %v1071 = vadd.f32 %v941, %v1070
        %v1072 = vpop.f32.mrf.mxu0
        %v1073 = vpop.f32.mrf.mxu0
        %v1074 = vadd.f32 %v941, %v1073
        %v1075 = vpop.f32.mrf.mxu0
        %1076 = vmatprep.mubr.bf16.mxu0 0
        %1077 = vmatmul.mubr.bf16.gmra.mxu0 %v972
        %v1078 = vpop.f32.mrf.mxu0
        %v1079 = vadd.f32 %v941, %v1078
        %v1080 = vpop.f32.mrf.mxu0
        %v1081 = vpop.f32.mrf.mxu0
        %v1082 = vadd.f32 %v941, %v1081
        %v1083 = vpop.f32.mrf.mxu0
        %1084 = vmatprep.mubr.bf16.mxu0 0
        %1085 = vmatmul.mubr.bf16.gmra.mxu0 %v975
        %v1086 = vpop.f32.mrf.mxu0
        %v1087 = vadd.f32 %v941, %v1086
        %v1088 = vpop.f32.mrf.mxu0
        %v1089 = vpop.f32.mrf.mxu0
        %v1090 = vadd.f32 %v941, %v1089
        %v1091 = vpop.f32.mrf.mxu0
        %1092 = vmatprep.mubr.bf16.mxu0 0
        %1093 = vmatmul.mubr.bf16.gmra.mxu0 %v978
        %v1094 = vpop.f32.mrf.mxu0
        %v1095 = vadd.f32 %v941, %v1094
        %v1096 = vpop.f32.mrf.mxu0
        %v1097 = vpop.f32.mrf.mxu0
        %v1098 = vadd.f32 %v941, %v1097
        %v1099 = vpop.f32.mrf.mxu0
        %1100 = vmatprep.mubr.bf16.mxu0 0
        %1101 = vmatmul.mubr.bf16.gmra.mxu0 %v981
        %v1102 = vpop.f32.mrf.mxu0
        %v1103 = vadd.f32 %v941, %v1102
        %v1104 = vpop.f32.mrf.mxu0
        %v1105 = vpop.f32.mrf.mxu0
        %v1106 = vadd.f32 %v941, %v1105
        %v1107 = vpop.f32.mrf.mxu0
        %1108 = vmatprep.mubr.bf16.mxu0 0
        %1109 = vmatmul.mubr.bf16.gmra.mxu0 %v984
        %v1110 = vpop.f32.mrf.mxu0
        %v1111 = vadd.f32 %v941, %v1110
        %v1112 = vpop.f32.mrf.mxu0
        %v1113 = vpop.f32.mrf.mxu0
        %v1114 = vadd.f32 %v941, %v1113
        %v1115 = vpop.f32.mrf.mxu0
        %1116 = vmatprep.mubr.bf16.mxu0 0
        %1117 = vmatmul.mubr.bf16.gmra.mxu0 %v987
        %v1118 = vpop.f32.mrf.mxu0
        %v1119 = vadd.f32 %v941, %v1118
        %v1120 = vpop.f32.mrf.mxu0
        %v1121 = vpop.f32.mrf.mxu0
        %v1122 = vadd.f32 %v941, %v1121
        %v1123 = vpop.f32.mrf.mxu0
        %1124 = vmatprep.mubr.bf16.mxu0 0
        %1125 = vmatmul.mubr.bf16.gmra.mxu0 %v990
        %v1126 = vpop.f32.mrf.mxu0
        %v1127 = vadd.f32 %v941, %v1126
        %v1128 = vpop.f32.mrf.mxu0
        %v1129 = vpop.f32.mrf.mxu0
        %v1130 = vadd.f32 %v941, %v1129
        %v1131 = vpop.f32.mrf.mxu0
        %1132 = vmatprep.mubr.bf16.mxu0 0
        %1133 = vmatmul.mubr.bf16.gmra.mxu0 %v993
        %v1134 = vpop.f32.mrf.mxu0
        %v1135 = vadd.f32 %v941, %v1134
        %v1136 = vpop.f32.mrf.mxu0
        %v1137 = vpop.f32.mrf.mxu0
        %v1138 = vadd.f32 %v941, %v1137
        %v1139 = vpop.f32.mrf.mxu0
        %1140 = vmatprep.mubr.bf16.mxu0 0
        %1141 = vmatmul.mubr.bf16.gmra.mxu0 %v996
        %v1142 = vpop.f32.mrf.mxu0
        %v1143 = vadd.f32 %v941, %v1142
        %v1144 = vpop.f32.mrf.mxu0
        %v1145 = vpop.f32.mrf.mxu0
        %v1146 = vadd.f32 %v941, %v1145
        %v1147 = vpop.f32.mrf.mxu0
        %1148 = vmatprep.mubr.bf16.mxu0 0
        %1149 = vmatmul.mubr.bf16.gmra.mxu0 %v999
        %v1150 = vpop.f32.mrf.mxu0
        %v1151 = vadd.f32 %v941, %v1150
        %v1152 = vpop.f32.mrf.mxu0
        %v1153 = vpop.f32.mrf.mxu0
        %v1154 = vadd.f32 %v941, %v1153
        %v1155 = vpop.f32.mrf.mxu0
        %1156 = vmatprep.mubr.bf16.mxu0 0
        %1157 = vmatmul.mubr.bf16.gmra.mxu0 %v1002
        %v1158 = vpop.f32.mrf.mxu0
        %v1159 = vadd.f32 %v941, %v1158
        %v1160 = vpop.f32.mrf.mxu0
        %v1161 = vpop.f32.mrf.mxu0
        %v1162 = vadd.f32 %v941, %v1161
        %v1163 = vpop.f32.mrf.mxu0
        %1164 = vdwg.mxu0
        %1165 = vxpose.xlu0.b32.start [1/16] %v884, 128
        %1166 = vxpose.xlu0.b32.cont [2/16] %v885, 128
        %1167 = vxpose.xlu0.b32.cont [3/16] %v886, 128
        %1168 = vxpose.xlu0.b32.cont [4/16] %v887, 128
        %1169 = vxpose.xlu0.b32.cont [5/16] %v888, 128
        %1170 = vxpose.xlu0.b32.cont [6/16] %v889, 128
        %1171 = vxpose.xlu0.b32.cont [7/16] %v890, 128
        %1172 = vxpose.xlu0.b32.cont [8/16] %v891, 128
        %1173 = vxpose.xlu0.b32.cont [9/16] %v892, 128
        %1174 = vxpose.xlu0.b32.cont [10/16] %v893, 128
        %1175 = vxpose.xlu0.b32.cont [11/16] %v894, 128
        %1176 = vxpose.xlu0.b32.cont [12/16] %v895, 128
        %1177 = vxpose.xlu0.b32.cont [13/16] %v896, 128
        %1178 = vxpose.xlu0.b32.cont [14/16] %v897, 128
        %1179 = vxpose.xlu0.b32.cont [15/16] %v898, 128
        %1180 = vxpose.xlu0.b32.end [16/16] %v899, 128
        %v1181 = vpop.trf.xlu0
        %v1182 = vpop.trf.xlu0
        %v1183 = vpop.trf.xlu0
        %v1184 = vpop.trf.xlu0
        %v1185 = vpop.trf.xlu0
        %v1186 = vpop.trf.xlu0
        %v1187 = vpop.trf.xlu0
        %v1188 = vpop.trf.xlu0
        %v1189 = vpop.trf.xlu0
        %v1190 = vpop.trf.xlu0
        %v1191 = vpop.trf.xlu0
        %v1192 = vpop.trf.xlu0
        %v1193 = vpop.trf.xlu0
        %v1194 = vpop.trf.xlu0
        %v1195 = vpop.trf.xlu0
        %v1196 = vpop.trf.xlu0
        %1197 = vxpose.xlu0.b32.start [1/16] %v900, 128
        %1198 = vxpose.xlu0.b32.cont [2/16] %v901, 128
        %1199 = vxpose.xlu0.b32.cont [3/16] %v902, 128
        %1200 = vxpose.xlu0.b32.cont [4/16] %v903, 128
        %1201 = vxpose.xlu0.b32.cont [5/16] %v904, 128
        %1202 = vxpose.xlu0.b32.cont [6/16] %v905, 128
        %1203 = vxpose.xlu0.b32.cont [7/16] %v906, 128
        %1204 = vxpose.xlu0.b32.cont [8/16] %v907, 128
        %1205 = vxpose.xlu0.b32.cont [9/16] %v908, 128
        %1206 = vxpose.xlu0.b32.cont [10/16] %v909, 128
        %1207 = vxpose.xlu0.b32.cont [11/16] %v910, 128
        %1208 = vxpose.xlu0.b32.cont [12/16] %v911, 128
        %1209 = vxpose.xlu0.b32.cont [13/16] %v912, 128
        %1210 = vxpose.xlu0.b32.cont [14/16] %v913, 128
        %1211 = vxpose.xlu0.b32.cont [15/16] %v914, 128
        %1212 = vxpose.xlu0.b32.end [16/16] %v915, 128
        %v1213 = vpop.trf.xlu0
        %v1214 = vpop.trf.xlu0
        %v1215 = vpop.trf.xlu0
        %v1216 = vpop.trf.xlu0
        %v1217 = vpop.trf.xlu0
        %v1218 = vpop.trf.xlu0
        %v1219 = vpop.trf.xlu0
        %v1220 = vpop.trf.xlu0
        %v1221 = vpop.trf.xlu0
        %v1222 = vpop.trf.xlu0
        %v1223 = vpop.trf.xlu0
        %v1224 = vpop.trf.xlu0
        %v1225 = vpop.trf.xlu0
        %v1226 = vpop.trf.xlu0
        %v1227 = vpop.trf.xlu0
        %v1228 = vpop.trf.xlu0
        %v1229 = vpack.c.bf16 %v1182, %v1181
        %v1230 = vpack.c.bf16 %v1214, %v1213
        %v1231 = vpack.c.bf16 %v1184, %v1183
        %v1232 = vpack.c.bf16 %v1216, %v1215
        %v1237 = vunpack.c.l.b16 %v1229
        %v1238 = vunpack.c.l.b16 %v1230
        %v1239 = vunpack.c.h.b16 %v1229
        %v1240 = vunpack.c.h.b16 %v1230
        %v1241 = vunpack.c.l.b16 %v1231
        %v1242 = vunpack.c.l.b16 %v1232
        %v1243 = vunpack.c.h.b16 %v1231
        %v1244 = vunpack.c.h.b16 %v1232
        %v1245 = vpack.c.b16 %v1238, %v1237
        %v1246 = vpack.c.b16 %v1240, %v1239
        %v1247 = vpack.c.b16 %v1242, %v1241
        %v1248 = vpack.c.b16 %v1244, %v1243
        %1253 = vst [vmem:[%s268] sm:$0xff] %v1245
        %1254 = vst [vmem:[%s268 + $0x8] sm:$0xff] %v1246
        %1255 = vst [vmem:[%s268 + $0x10] sm:$0xff] %v1247
        %1256 = vst [vmem:[%s268 + $0x18] sm:$0xff] %v1248
        %1257 = vxpose.xlu0.b32.start [1/16] %v611, 128
        %1258 = vxpose.xlu0.b32.cont [2/16] %v612, 128
        %1259 = vxpose.xlu0.b32.cont [3/16] %v613, 128
        %1260 = vxpose.xlu0.b32.cont [4/16] %v614, 128
        %1261 = vxpose.xlu0.b32.cont [5/16] %v615, 128
        %1262 = vxpose.xlu0.b32.cont [6/16] %v616, 128
        %1263 = vxpose.xlu0.b32.cont [7/16] %v617, 128
        %1264 = vxpose.xlu0.b32.cont [8/16] %v618, 128
        %1265 = vxpose.xlu0.b32.cont [9/16] %v619, 128
        %1266 = vxpose.xlu0.b32.cont [10/16] %v620, 128
        %1267 = vxpose.xlu0.b32.cont [11/16] %v621, 128
        %1268 = vxpose.xlu0.b32.cont [12/16] %v622, 128
        %1269 = vxpose.xlu0.b32.cont [13/16] %v623, 128
        %1270 = vxpose.xlu0.b32.cont [14/16] %v624, 128
        %1271 = vxpose.xlu0.b32.cont [15/16] %v625, 128
        %1272 = vxpose.xlu0.b32.end [16/16] %v626, 128
        %v1273 = vpop.trf.xlu0
        %v1274 = vpop.trf.xlu0
        %v1275 = vpop.trf.xlu0
        %v1276 = vpop.trf.xlu0
        %v1277 = vpop.trf.xlu0
        %v1278 = vpop.trf.xlu0
        %v1279 = vpop.trf.xlu0
        %v1280 = vpop.trf.xlu0
        %v1281 = vpop.trf.xlu0
        %v1282 = vpop.trf.xlu0
        %v1283 = vpop.trf.xlu0
        %v1284 = vpop.trf.xlu0
        %v1285 = vpop.trf.xlu0
        %v1286 = vpop.trf.xlu0
        %v1287 = vpop.trf.xlu0
        %v1288 = vpop.trf.xlu0
        %1289 = vxpose.xlu0.b32.start [1/16] %v627, 128
        %1290 = vxpose.xlu0.b32.cont [2/16] %v628, 128
        %1291 = vxpose.xlu0.b32.cont [3/16] %v629, 128
        %1292 = vxpose.xlu0.b32.cont [4/16] %v630, 128
        %1293 = vxpose.xlu0.b32.cont [5/16] %v631, 128
        %1294 = vxpose.xlu0.b32.cont [6/16] %v632, 128
        %1295 = vxpose.xlu0.b32.cont [7/16] %v633, 128
        %1296 = vxpose.xlu0.b32.cont [8/16] %v634, 128
        %1297 = vxpose.xlu0.b32.cont [9/16] %v635, 128
        %1298 = vxpose.xlu0.b32.cont [10/16] %v636, 128
        %1299 = vxpose.xlu0.b32.cont [11/16] %v637, 128
        %1300 = vxpose.xlu0.b32.cont [12/16] %v638, 128
        %1301 = vxpose.xlu0.b32.cont [13/16] %v639, 128
        %1302 = vxpose.xlu0.b32.cont [14/16] %v640, 128
        %1303 = vxpose.xlu0.b32.cont [15/16] %v641, 128
        %1304 = vxpose.xlu0.b32.end [16/16] %v642, 128
        %v1305 = vpop.trf.xlu0
        %v1306 = vpop.trf.xlu0
        %v1307 = vpop.trf.xlu0
        %v1308 = vpop.trf.xlu0
        %v1309 = vpop.trf.xlu0
        %v1310 = vpop.trf.xlu0
        %v1311 = vpop.trf.xlu0
        %v1312 = vpop.trf.xlu0
        %v1313 = vpop.trf.xlu0
        %v1314 = vpop.trf.xlu0
        %v1315 = vpop.trf.xlu0
        %v1316 = vpop.trf.xlu0
        %v1317 = vpop.trf.xlu0
        %v1318 = vpop.trf.xlu0
        %v1319 = vpop.trf.xlu0
        %v1320 = vpop.trf.xlu0
        %v1321 = vpack.c.bf16 %v1274, %v1273
        %v1322 = vpack.c.bf16 %v1306, %v1305
        %v1325 = vunpack.c.l.b16 %v1321
        %v1326 = vunpack.c.l.b16 %v1322
        %v1327 = vunpack.c.h.b16 %v1321
        %v1328 = vunpack.c.h.b16 %v1322
        %v1329 = vpack.c.b16 %v1326, %v1325
        %v1330 = vpack.c.b16 %v1328, %v1327
        %1333 = vst [vmem:[%s268 + $0x20] sm:$0xff] %v1329
        %1334 = vst [vmem:[%s268 + $0x28] sm:$0xff] %v1330
        %1335 = vxpose.xlu0.b32.start [1/16] %v1039, 128
        %1336 = vxpose.xlu0.b32.cont [2/16] %v1042, 128
        %1337 = vxpose.xlu0.b32.cont [3/16] %v1047, 128
        %1338 = vxpose.xlu0.b32.cont [4/16] %v1050, 128
        %1339 = vxpose.xlu0.b32.cont [5/16] %v1055, 128
        %1340 = vxpose.xlu0.b32.cont [6/16] %v1058, 128
        %1341 = vxpose.xlu0.b32.cont [7/16] %v1063, 128
        %1342 = vxpose.xlu0.b32.cont [8/16] %v1066, 128
        %1343 = vxpose.xlu0.b32.cont [9/16] %v1071, 128
        %1344 = vxpose.xlu0.b32.cont [10/16] %v1074, 128
        %1345 = vxpose.xlu0.b32.cont [11/16] %v1079, 128
        %1346 = vxpose.xlu0.b32.cont [12/16] %v1082, 128
        %1347 = vxpose.xlu0.b32.cont [13/16] %v1087, 128
        %1348 = vxpose.xlu0.b32.cont [14/16] %v1090, 128
        %1349 = vxpose.xlu0.b32.cont [15/16] %v1095, 128
        %1350 = vxpose.xlu0.b32.end [16/16] %v1098, 128
        %v1351 = vpop.trf.xlu0
        %v1352 = vpop.trf.xlu0
        %v1353 = vpop.trf.xlu0
        %v1354 = vpop.trf.xlu0
        %v1355 = vpop.trf.xlu0
        %v1356 = vpop.trf.xlu0
        %v1357 = vpop.trf.xlu0
        %v1358 = vpop.trf.xlu0
        %v1359 = vpop.trf.xlu0
        %v1360 = vpop.trf.xlu0
        %v1361 = vpop.trf.xlu0
        %v1362 = vpop.trf.xlu0
        %v1363 = vpop.trf.xlu0
        %v1364 = vpop.trf.xlu0
        %v1365 = vpop.trf.xlu0
        %v1366 = vpop.trf.xlu0
        %1367 = vxpose.xlu0.b32.start [1/16] %v1103, 128
        %1368 = vxpose.xlu0.b32.cont [2/16] %v1106, 128
        %1369 = vxpose.xlu0.b32.cont [3/16] %v1111, 128
        %1370 = vxpose.xlu0.b32.cont [4/16] %v1114, 128
        %1371 = vxpose.xlu0.b32.cont [5/16] %v1119, 128
        %1372 = vxpose.xlu0.b32.cont [6/16] %v1122, 128
        %1373 = vxpose.xlu0.b32.cont [7/16] %v1127, 128
        %1374 = vxpose.xlu0.b32.cont [8/16] %v1130, 128
        %1375 = vxpose.xlu0.b32.cont [9/16] %v1135, 128
        %1376 = vxpose.xlu0.b32.cont [10/16] %v1138, 128
        %1377 = vxpose.xlu0.b32.cont [11/16] %v1143, 128
        %1378 = vxpose.xlu0.b32.cont [12/16] %v1146, 128
        %1379 = vxpose.xlu0.b32.cont [13/16] %v1151, 128
        %1380 = vxpose.xlu0.b32.cont [14/16] %v1154, 128
        %1381 = vxpose.xlu0.b32.cont [15/16] %v1159, 128
        %1382 = vxpose.xlu0.b32.end [16/16] %v1162, 128
        %v1383 = vpop.trf.xlu0
        %v1384 = vpop.trf.xlu0
        %v1385 = vpop.trf.xlu0
        %v1386 = vpop.trf.xlu0
        %v1387 = vpop.trf.xlu0
        %v1388 = vpop.trf.xlu0
        %v1389 = vpop.trf.xlu0
        %v1390 = vpop.trf.xlu0
        %v1391 = vpop.trf.xlu0
        %v1392 = vpop.trf.xlu0
        %v1393 = vpop.trf.xlu0
        %v1394 = vpop.trf.xlu0
        %v1395 = vpop.trf.xlu0
        %v1396 = vpop.trf.xlu0
        %v1397 = vpop.trf.xlu0
        %v1398 = vpop.trf.xlu0
        %v1399 = vpack.c.bf16 %v1351, %v1351
        %v1400 = vpack.c.bf16 %v1383, %v1383
        %v1403 = vunpack.c.l.b16 %v1399
        %v1404 = vunpack.c.l.b16 %v1400
        %v1405 = vpack.c.b16 %v1404, %v1403
        %1407 = vst [vmem:[%s268 + $0x30] sm:$0xff] %v1405
        %1440 = vrot.lane.b32.xlu0 %v758, 96
        %v1441 = vpop.permute.xlu0 %1440
        %1442 = vrot.lane.b32.xlu0 %v761, 96
        %v1443 = vpop.permute.xlu0 %1442
        %1444 = vrot.lane.b32.xlu0 %v766, 96
        %v1445 = vpop.permute.xlu0 %1444
        %1446 = vrot.lane.b32.xlu0 %v769, 96
        %v1447 = vpop.permute.xlu0 %1446
        %1448 = vrot.lane.b32.xlu0 %v774, 96
        %v1449 = vpop.permute.xlu0 %1448
        %1450 = vrot.lane.b32.xlu0 %v777, 96
        %v1451 = vpop.permute.xlu0 %1450
        %1452 = vrot.lane.b32.xlu0 %v782, 96
        %v1453 = vpop.permute.xlu0 %1452
        %1454 = vrot.lane.b32.xlu0 %v785, 96
        %v1455 = vpop.permute.xlu0 %1454
        %1456 = vrot.lane.b32.xlu0 %v790, 96
        %v1457 = vpop.permute.xlu0 %1456
        %1458 = vrot.lane.b32.xlu0 %v793, 96
        %v1459 = vpop.permute.xlu0 %1458
        %1460 = vrot.lane.b32.xlu0 %v798, 96
        %v1461 = vpop.permute.xlu0 %1460
        %1462 = vrot.lane.b32.xlu0 %v801, 96
        %v1463 = vpop.permute.xlu0 %1462
        %1464 = vrot.lane.b32.xlu0 %v806, 96
        %v1465 = vpop.permute.xlu0 %1464
        %1466 = vrot.lane.b32.xlu0 %v809, 96
        %v1467 = vpop.permute.xlu0 %1466
        %1468 = vrot.lane.b32.xlu0 %v814, 96
        %v1469 = vpop.permute.xlu0 %1468
        %1470 = vrot.lane.b32.xlu0 %v817, 96
        %v1471 = vpop.permute.xlu0 %1470
        %1472 = vrot.lane.b32.xlu0 %v822, 96
        %v1473 = vpop.permute.xlu0 %1472
        %1474 = vrot.lane.b32.xlu0 %v825, 96
        %v1475 = vpop.permute.xlu0 %1474
        %1476 = vrot.lane.b32.xlu0 %v830, 96
        %v1477 = vpop.permute.xlu0 %1476
        %1478 = vrot.lane.b32.xlu0 %v833, 96
        %v1479 = vpop.permute.xlu0 %1478
        %1480 = vrot.lane.b32.xlu0 %v838, 96
        %v1481 = vpop.permute.xlu0 %1480
        %1482 = vrot.lane.b32.xlu0 %v841, 96
        %v1483 = vpop.permute.xlu0 %1482
        %1484 = vrot.lane.b32.xlu0 %v846, 96
        %v1485 = vpop.permute.xlu0 %1484
        %1486 = vrot.lane.b32.xlu0 %v849, 96
        %v1487 = vpop.permute.xlu0 %1486
        %1488 = vrot.lane.b32.xlu0 %v854, 96
        %v1489 = vpop.permute.xlu0 %1488
        %1490 = vrot.lane.b32.xlu0 %v857, 96
        %v1491 = vpop.permute.xlu0 %1490
        %1492 = vrot.lane.b32.xlu0 %v862, 96
        %v1493 = vpop.permute.xlu0 %1492
        %1494 = vrot.lane.b32.xlu0 %v865, 96
        %v1495 = vpop.permute.xlu0 %1494
        %1496 = vrot.lane.b32.xlu0 %v870, 96
        %v1497 = vpop.permute.xlu0 %1496
        %1498 = vrot.lane.b32.xlu0 %v873, 96
        %v1499 = vpop.permute.xlu0 %1498
        %1500 = vrot.lane.b32.xlu0 %v878, 96
        %v1501 = vpop.permute.xlu0 %1500
        %1502 = vrot.lane.b32.xlu0 %v881, 96
        %v1503 = vpop.permute.xlu0 %1502
        %1536 = vxpose.xlu0.b32.start [1/16] %v1441, 128
        %1537 = vxpose.xlu0.b32.cont [2/16] %v1443, 128
        %1538 = vxpose.xlu0.b32.cont [3/16] %v1445, 128
        %1539 = vxpose.xlu0.b32.cont [4/16] %v1447, 128
        %1540 = vxpose.xlu0.b32.cont [5/16] %v1449, 128
        %1541 = vxpose.xlu0.b32.cont [6/16] %v1451, 128
        %1542 = vxpose.xlu0.b32.cont [7/16] %v1453, 128
        %1543 = vxpose.xlu0.b32.cont [8/16] %v1455, 128
        %1544 = vxpose.xlu0.b32.cont [9/16] %v1457, 128
        %1545 = vxpose.xlu0.b32.cont [10/16] %v1459, 128
        %1546 = vxpose.xlu0.b32.cont [11/16] %v1461, 128
        %1547 = vxpose.xlu0.b32.cont [12/16] %v1463, 128
        %1548 = vxpose.xlu0.b32.cont [13/16] %v1465, 128
        %1549 = vxpose.xlu0.b32.cont [14/16] %v1467, 128
        %1550 = vxpose.xlu0.b32.cont [15/16] %v1469, 128
        %1551 = vxpose.xlu0.b32.end [16/16] %v1471, 128
        %v1552 = vpop.trf.xlu0
        %v1553 = vpop.trf.xlu0
        %v1554 = vpop.trf.xlu0
        %v1555 = vpop.trf.xlu0
        %v1556 = vpop.trf.xlu0
        %v1557 = vpop.trf.xlu0
        %v1558 = vpop.trf.xlu0
        %v1559 = vpop.trf.xlu0
        %v1560 = vpop.trf.xlu0
        %v1561 = vpop.trf.xlu0
        %v1562 = vpop.trf.xlu0
        %v1563 = vpop.trf.xlu0
        %v1564 = vpop.trf.xlu0
        %v1565 = vpop.trf.xlu0
        %v1566 = vpop.trf.xlu0
        %v1567 = vpop.trf.xlu0
        %1568 = vxpose.xlu0.b32.start [1/16] %v1473, 128
        %1569 = vxpose.xlu0.b32.cont [2/16] %v1475, 128
        %1570 = vxpose.xlu0.b32.cont [3/16] %v1477, 128
        %1571 = vxpose.xlu0.b32.cont [4/16] %v1479, 128
        %1572 = vxpose.xlu0.b32.cont [5/16] %v1481, 128
        %1573 = vxpose.xlu0.b32.cont [6/16] %v1483, 128
        %1574 = vxpose.xlu0.b32.cont [7/16] %v1485, 128
        %1575 = vxpose.xlu0.b32.cont [8/16] %v1487, 128
        %1576 = vxpose.xlu0.b32.cont [9/16] %v1489, 128
        %1577 = vxpose.xlu0.b32.cont [10/16] %v1491, 128
        %1578 = vxpose.xlu0.b32.cont [11/16] %v1493, 128
        %1579 = vxpose.xlu0.b32.cont [12/16] %v1495, 128
        %1580 = vxpose.xlu0.b32.cont [13/16] %v1497, 128
        %1581 = vxpose.xlu0.b32.cont [14/16] %v1499, 128
        %1582 = vxpose.xlu0.b32.cont [15/16] %v1501, 128
        %1583 = vxpose.xlu0.b32.end [16/16] %v1503, 128
        %v1584 = vpop.trf.xlu0
        %v1585 = vpop.trf.xlu0
        %v1586 = vpop.trf.xlu0
        %v1587 = vpop.trf.xlu0
        %v1588 = vpop.trf.xlu0
        %v1589 = vpop.trf.xlu0
        %v1590 = vpop.trf.xlu0
        %v1591 = vpop.trf.xlu0
        %v1592 = vpop.trf.xlu0
        %v1593 = vpop.trf.xlu0
        %v1594 = vpop.trf.xlu0
        %v1595 = vpop.trf.xlu0
        %v1596 = vpop.trf.xlu0
        %v1597 = vpop.trf.xlu0
        %v1598 = vpop.trf.xlu0
        %v1599 = vpop.trf.xlu0
        %v1600 = vpack.c.bf16 %v1552, %v1552
        %v1601 = vpack.c.bf16 %v1584, %v1584
        %v1604 = vunpack.c.l.b16 %v1600
        %v1605 = vunpack.c.l.b16 %v1601
        %v1606 = vpack.c.b16 %v1605, %v1604
        %1608 = vst [vmem:[%s268 + $0x38] sm:$0xff] %v1606
        %s1609 = sand.u32 %s178, 1
        %s1610 = sand.u32 %s178, 1
        %s1611 = smul.addr %s1610, 64
        %s1612 = scalar_lea.vmem [#allocation2], %s1611
        // Predicated region
        $region49: #{simple_segmentation_forward.1} parent=47 // pred_check
          %p1613 = pneg %p188
        $region50: #{simple_segmentation_forward.1} parent=47 // pred_check_branch
          %1615 = sbr.rel (%p1613) target = $region52
        $region51: #{simple_segmentation_forward.1} parent=47 // pred_region
          %s1616 = smul.u32 2, %s18
          %s1617 = smul.addr %s1616, 4
          %s1618 = scalar_lea.vmem %s7, %s1617
          // Predicated region
          $region53: #{simple_segmentation_forward.1} parent=51 // pred_check
            _
          $region54: #{simple_segmentation_forward.1} parent=51 // pred_check_branch
            %1620 = sbr.rel (0) target = $region56
          $region55: #{simple_segmentation_forward.1} parent=51 // pred_region
            // Predicated region
            $region57: #{simple_segmentation_forward.1} parent=55 // pred_check
              _
            $region58: #{simple_segmentation_forward.1} parent=55 // pred_check_branch
              %1622 = sbr.rel (0) target = $region60
            $region59: #{simple_segmentation_forward.1} parent=55 // pred_region
              // Predicated region
              $region72: #{simple_segmentation_forward.1} parent=59 // pred_check
                _
              $region73: #{simple_segmentation_forward.1} parent=59 // pred_check_branch
                %1652 = sbr.rel (0) target = $region75
              $region74: #{simple_segmentation_forward.1} parent=59 // pred_region
                loop: start=0, step=1, limit=1
                $region76: #{simple_segmentation_forward.1} parent=74 // loop_pre_header
                  _
                $region77: #{simple_segmentation_forward.1} parent=74 // loop_header
                  %s1654 = sphi 0, %s1658
                  %p1655 = scmp.ge.s32.totalorder %s1654, 1
                  %s1659 = sphi %s1612, %s1612
                  %s1660 = sphi %s1618, %s1618
                $region78: #{simple_segmentation_forward.1} parent=74 // loop_header_branch
                  %1657 = sbr.rel (%p1655) target = $region82
                $region79: #{simple_segmentation_forward.1} parent=74 // loop_body
                  %v1661 = vld [vmem:[%s1659] sm:$0xff]
                  %1662 = vst [vmem:[%s1660] sm:$0xff] %v1661
                  %v1663 = vld [vmem:[%s1659 + $0x8] sm:$0xff]
                  %1664 = vst [vmem:[%s1660 + $0x10] sm:$0xff] %v1663
                  %v1665 = vld [vmem:[%s1659 + $0x10] sm:$0xff]
                  %1666 = vst [vmem:[%s1660 + $0x20] sm:$0xff] %v1665
                  %v1667 = vld [vmem:[%s1659 + $0x18] sm:$0xff]
                  %1668 = vst [vmem:[%s1660 + $0x30] sm:$0xff] %v1667
                  %v1669 = vld [vmem:[%s1659 + $0x20] sm:$0xff]
                  %1670 = vst [vmem:[%s1660 + $0x40] sm:$0xff] %v1669
                  %v1671 = vld [vmem:[%s1659 + $0x28] sm:$0xff]
                  %1672 = vst [vmem:[%s1660 + $0x50] sm:$0xff] %v1671
                  %v1673 = vld [vmem:[%s1659 + $0x30] sm:$0xff]
                  %1674 = vst [vmem:[%s1660 + $0x60] sm:$0xff] %v1673
                  %v1675 = vld [vmem:[%s1659 + $0x38] sm:$0xff]
                  %1676 = vst [vmem:[%s1660 + $0x70] sm:$0xff] %v1675
                $region80: #{simple_segmentation_forward.1} parent=74 // loop_footer
                  %s1658 = sadd.s32 1, %s1654
                $region81: #{simple_segmentation_forward.1} parent=74 // loop_footer_branch
                  %1653 = sbr.rel target = $region77
                $region82: #{simple_segmentation_forward.1} parent=74 // loop_exit
                  _
              $region75: #{simple_segmentation_forward.1} parent=59 // pred_fallthru
                _
              // Predicated region
              $region83: #{simple_segmentation_forward.1} parent=59 // pred_check
                _
              $region84: #{simple_segmentation_forward.1} parent=59 // pred_check_branch
                %1678 = sbr.rel target = $region86
              $region85: #{simple_segmentation_forward.1} parent=59 // pred_region
                _
              $region86: #{simple_segmentation_forward.1} parent=59 // pred_fallthru
                _
            $region60: #{simple_segmentation_forward.1} parent=55 // pred_fallthru
              _
            // Predicated region
            $region61: #{simple_segmentation_forward.1} parent=55 // pred_check
              _
            $region62: #{simple_segmentation_forward.1} parent=55 // pred_check_branch
              %1624 = sbr.rel target = $region64
            $region63: #{simple_segmentation_forward.1} parent=55 // pred_region
              %s1626 = ssub.s32 256, 1
              loop: start=0, step=1, limit=1
              $region65: #{simple_segmentation_forward.1} parent=63 // loop_pre_header
                _
              $region66: #{simple_segmentation_forward.1} parent=63 // loop_header
                %s1628 = sphi 0, %s1632
                %p1629 = scmp.ge.s32.totalorder %s1628, 1
                %s1633 = sphi %s1612, %s1612
                %s1634 = sphi %s1618, %s1618
              $region67: #{simple_segmentation_forward.1} parent=63 // loop_header_branch
                %1631 = sbr.rel (%p1629) target = $region71
              $region68: #{simple_segmentation_forward.1} parent=63 // loop_body
                %v1635 = vld [vmem:[%s1633] sm:%s1626]
                %1636 = vst [vmem:[%s1634] sm:%s1626] %v1635
                %v1637 = vld [vmem:[%s1633 + $0x8] sm:%s1626]
                %1638 = vst [vmem:[%s1634 + $0x10] sm:%s1626] %v1637
                %v1639 = vld [vmem:[%s1633 + $0x10] sm:%s1626]
                %1640 = vst [vmem:[%s1634 + $0x20] sm:%s1626] %v1639
                %v1641 = vld [vmem:[%s1633 + $0x18] sm:%s1626]
                %1642 = vst [vmem:[%s1634 + $0x30] sm:%s1626] %v1641
                %v1643 = vld [vmem:[%s1633 + $0x20] sm:%s1626]
                %1644 = vst [vmem:[%s1634 + $0x40] sm:%s1626] %v1643
                %v1645 = vld [vmem:[%s1633 + $0x28] sm:%s1626]
                %1646 = vst [vmem:[%s1634 + $0x50] sm:%s1626] %v1645
                %v1647 = vld [vmem:[%s1633 + $0x30] sm:%s1626]
                %1648 = vst [vmem:[%s1634 + $0x60] sm:%s1626] %v1647
                %v1649 = vld [vmem:[%s1633 + $0x38] sm:%s1626]
                %1650 = vst [vmem:[%s1634 + $0x70] sm:%s1626] %v1649
              $region69: #{simple_segmentation_forward.1} parent=63 // loop_footer
                %s1632 = sadd.s32 1, %s1628
              $region70: #{simple_segmentation_forward.1} parent=63 // loop_footer_branch
                %1627 = sbr.rel target = $region66
              $region71: #{simple_segmentation_forward.1} parent=63 // loop_exit
                _
            $region64: #{simple_segmentation_forward.1} parent=55 // pred_fallthru
              _
          $region56: #{simple_segmentation_forward.1} parent=51 // pred_fallthru
            _
          %1679 = vnop
        $region52: #{simple_segmentation_forward.1} parent=47 // pred_fallthru
          _
      $region48: #{simple_segmentation_forward.1} parent=5 // pred_fallthru
        _
      %p1680 = scmp.le.s32.totalorder 2, %s13
      // Predicated region
      $region87: #{simple_segmentation_forward.1} parent=5 // pred_check
        %p1681 = pneg %p1680
      $region88: #{simple_segmentation_forward.1} parent=5 // pred_check_branch
        %1683 = sbr.rel (%p1681) target = $region90
      $region89: #{simple_segmentation_forward.1} parent=5 // pred_region
        %s1684 = ssub.s32 %s13, 2
        // Predicated region
        $region91: #{simple_segmentation_forward.1} parent=89 // pred_check
          %p1685 = pneg %p194
        $region92: #{simple_segmentation_forward.1} parent=89 // pred_check_branch
          %1687 = sbr.rel (%p1685) target = $region94
        $region93: #{simple_segmentation_forward.1} parent=89 // pred_region
          %s1688 = sand.u32 %s179, 1
          %s1689 = sand.u32 %s179, 1
          %s1690 = smul.addr %s1689, 64
          %s1691 = scalar_lea.vmem [#allocation2], %s1690
        $region94: #{simple_segmentation_forward.1} parent=89 // pred_fallthru
          _
      $region90: #{simple_segmentation_forward.1} parent=5 // pred_fallthru
        _
    $region6: #{simple_segmentation_forward.1} parent=1 // loop_footer
      %s17 = sadd.s32 1, %s13
    $region7: #{simple_segmentation_forward.1} parent=1 // loop_footer_branch
      %12 = sbr.rel target = $region3
    $region8: #{simple_segmentation_forward.1} parent=1 // loop_exit
      _

</llo_original>
